<compile_context>
chip_gen: v7x
topology: tpu7x:2x2x1
jax: 0.10.0
libtpu: 0.0.40
codegen_flags: <defaults>
</compile_context>

<pallas_src>
import functools

import jax
import jax.numpy as jnp
import numpy as np
from jax.experimental import pallas as pl
from jax.experimental.pallas import tpu as pltpu

_BN_EPS = 1e-5                          # torch.nn.BatchNorm1d default
_VMEM_BUDGET_BYTES = 24 * 1024 * 1024   # tile-selection budget (fits v5e/v6e/v7x)
_VMEM_LIMIT_BYTES = 48 * 1024 * 1024    # raised scoped VMEM limit (< v7x's 64 MiB)
_TM_CAP = 4096                          # row-tile cap (v7x-safe per review)
_WIDTH_ALIGN = 128                      # pad hidden widths to lane-native multiples


def _round_up(x, m):
    return ((x + m - 1) // m) * m


# ----------------------------- host-side parameter folds -----------------------------

def fold_encoder_params(linears, bns, eps=_BN_EPS, width_align=_WIDTH_ALIGN):
    """Fold eval-mode BatchNorm1d into each preceding Linear, zero-pad hidden widths
    up to a multiple of 128 (ELU(0)=0 keeps semantics), transpose, and cast the
    weights to bf16 for single-pass MXU matmuls.  Biases stay f32 (they add into the
    f32 accumulator).

    linears: list of (W: (out, in), b: (out,)) as in nn.Linear (last has no BN).
    bns    : list of (gamma, beta, running_mean, running_var) per hidden layer.
    Returns ([W_eff^T bf16 (din_p, dout_p)], [b_eff f32 (1, dout_p)]).
    """
    n = len(linears)
    wts, bs = [], []
    prev_dout_p = None
    for idx, (w, b) in enumerate(linears):
        wt = w.astype(jnp.float32).T            # (din, dout)
        bb = b.astype(jnp.float32)
        if idx < n - 1:
            gamma, beta, mean, var = (t.astype(jnp.float32) for t in bns[idx])
            scale = gamma / jnp.sqrt(var + eps)
            wt = wt * scale[None, :]
            bb = bb * scale + (beta - mean * scale)
        din, dout = int(wt.shape[0]), int(wt.shape[1])
        din_p = din if idx == 0 else prev_dout_p            # match previous padded width
        dout_p = dout if idx == n - 1 else _round_up(dout, width_align)
        wt = jnp.pad(wt, ((0, din_p - din), (0, dout_p - dout)))
        bb = jnp.pad(bb, (0, dout_p - dout)).reshape(1, dout_p)
        wts.append(wt.astype(jnp.bfloat16))
        bs.append(bb)
        prev_dout_p = dout_p
    return wts, bs


def fold_head_params(weight, bias, num_bin):
    """MultiBinaryLayer fold: softmax([a, c]) over the class axis equals
    [sigmoid(a-c), sigmoid(c-a)], and the column difference is linear in the
    encoding, so fold it into the transposed weight/bias.  weight: (2*num_bin, D)."""
    two_nb = 2 * num_bin
    wt = weight.astype(jnp.float32).T           # (D, 2*num_bin)
    bv = bias.astype(jnp.float32)
    wt_eff = wt - jnp.concatenate([wt[:, num_bin:], wt[:, :num_bin]], axis=1)
    b_eff = (bv - jnp.concatenate([bv[num_bin:], bv[:num_bin]])).reshape(1, two_nb)
    return wt_eff.astype(jnp.bfloat16), b_eff


# --------------------------------- fused kernel ---------------------------------

def _fused_kernel(x_ref, *refs, n_layers):
    # x_ref : (tm, dim_x) VMEM row tile (f32)
    # refs  : n_layers bf16 folded weights, n_layers (1, dout) f32 biases,
    #         head bf16 folded weight, head f32 folded bias,
    #         encoding out ref, flat-probs out ref.
    w_refs = refs[:n_layers]
    b_refs = refs[n_layers:2 * n_layers]
    hw_ref = refs[2 * n_layers]
    hb_ref = refs[2 * n_layers + 1]
    enc_ref = refs[2 * n_layers + 2]
    probs_ref = refs[2 * n_layers + 3]

    h = x_ref[...].astype(jnp.float32)
    for l in range(n_layers):
        # bf16 x bf16 -> single-pass MXU, f32 accumulate; f32 bias add.
        h = jnp.dot(h.astype(jnp.bfloat16), w_refs[l][...],
                    preferred_element_type=jnp.float32) + b_refs[l][...]
        if l < n_layers - 1:
            # Eval-mode BN is pre-folded into w/b; Dropout is identity at inference.
            # ELU(alpha=1) kept in f32 (safe on v5e, which has no bf16 VPU/EUP).
            h = jnp.where(h > 0.0, h, jnp.exp(jnp.minimum(h, 0.0)) - 1.0)
    enc_ref[...] = h.astype(enc_ref.dtype)

    # MultiBinaryLayer head fused on the same row tile (no HBM round trip).
    # The 2-way softmax was folded into hw/hb on the host: plain matmul + sigmoid.
    d = jnp.dot(h.astype(jnp.bfloat16), hw_ref[...],
                preferred_element_type=jnp.float32) + hb_ref[...]
    # exp(-d) may overflow to +inf for very negative d; 1/(1+inf) == 0.0 is still
    # the correct f32 result with the exact divide used here.
    probs_ref[...] = (1.0 / (1.0 + jnp.exp(-d))).astype(probs_ref.dtype)


# ----------------------------------- wrapper -----------------------------------

def _choose_tm(n_rows, dim_x, width_p, dim_enc, two_nb,
               budget=_VMEM_BUDGET_BYTES, cap=_TM_CAP):
    """Row-tile size from a VMEM budget: double-buffered input/output row tiles plus
    ~3 live intermediate activations of the padded hidden width (f32), 256-aligned
    for the MXU M-dim, capped so v7x's 64 MiB VMEM is never at risk."""
    per_row_bytes = 4 * (2 * dim_x + 2 * dim_enc + 2 * two_nb + 3 * width_p)
    tm = max(budget // max(per_row_bytes, 1), 8)
    tm = int(min(tm, cap))
    tm = (tm // 256) * 256 if tm >= 256 else max((tm // 8) * 8, 8)
    tm = min(tm, _round_up(n_rows, 8))
    return max(tm, 8)


def simulation_net_forward(x, enc_linears, enc_bns, head_weight, head_bias, num_bin,
                           tm=None):
    """SimulationNet.forward for cls_model='or' (inference semantics), fused into a
    single row-tiled Pallas kernel.  Returns (probs (N, 2, num_bin), encoding).
    # TODO(synk): training-mode BatchNorm (batch stats) / Dropout sampling and the
    # other cls_model heads ('mcc'/'conor'/'gl'/'lgl'/'bc') are not implemented here.
    """
    wts, bs = fold_encoder_params(enc_linears, enc_bns)
    head_wt, head_b = fold_head_params(head_weight, head_bias, num_bin)

    n, dim_x = int(x.shape[0]), int(x.shape[1])
    n_layers = len(wts)
    dim_enc = int(wts[-1].shape[1])
    two_nb = 2 * num_bin
    width_p = max(int(w.shape[1]) for w in wts)
    if tm is None:
        tm = _choose_tm(n, dim_x, width_p, dim_enc, two_nb)
    grid = (pl.cdiv(n, tm),)     # partial final block: Pallas masks the tail writes

    in_specs = [pl.BlockSpec((tm, dim_x), lambda i: (i, 0))]
    # grid-invariant weights/biases stay VMEM-resident
    in_specs += [pl.BlockSpec(tuple(w.shape), lambda i: (0, 0)) for w in wts]
    in_specs += [pl.BlockSpec(tuple(b.shape), lambda i: (0, 0)) for b in bs]
    in_specs += [pl.BlockSpec(tuple(head_wt.shape), lambda i: (0, 0)),
                 pl.BlockSpec(tuple(head_b.shape), lambda i: (0, 0))]

    out_shape = (jax.ShapeDtypeStruct((n, dim_enc), jnp.float32),
                 jax.ShapeDtypeStruct((n, two_nb), jnp.float32))
    out_specs = [pl.BlockSpec((tm, dim_enc), lambda i: (i, 0)),
                 pl.BlockSpec((tm, two_nb), lambda i: (i, 0))]

    weight_elems = (sum(int(w.shape[0]) * int(w.shape[1]) for w in wts)
                    + int(head_wt.shape[0]) * int(head_wt.shape[1]))
    hidden_elems = sum(int(w.shape[1]) for w in wts[:-1])
    cost = pl.CostEstimate(
        flops=2 * n * weight_elems,
        transcendentals=n * (hidden_elems + two_nb),
        bytes_accessed=4 * n * (dim_x + dim_enc + two_nb) + 2 * weight_elems)

    encoding, probs_flat = pl.pallas_call(
        functools.partial(_fused_kernel, n_layers=n_layers),
        out_shape=out_shape,
        grid_spec=pltpu.PrefetchScalarGridSpec(
            num_scalar_prefetch=0,
            grid=grid,
            in_specs=in_specs,
            out_specs=out_specs),
        compiler_params=pltpu.CompilerParams(
            dimension_semantics=("parallel",),
            vmem_limit_bytes=_VMEM_LIMIT_BYTES),
        cost_estimate=cost,
    )(x.astype(jnp.float32), *wts, *bs, head_wt, head_b)

    # Zero-cost wrapper reshape: (N, 2*num_bin) -> (N, 2, num_bin), matching
    # PyTorch's x.view(-1, 2, num_bin) followed by softmax(dim=1).
    probs = probs_flat.reshape(n, 2, num_bin)
    return probs, encoding


# ------------------------------------- demo -------------------------------------

if __name__ == "__main__":
    # Small deterministic shapes consistent with the module (hiddens_width=100 and
    # hiddens_depth=8 are hard-coded inside SimulationNet).
    N = 16
    dim_x = 24
    dim_encoding = 32
    num_bin = 16
    hidden_width, hidden_depth = 100, 8

    key = jax.random.PRNGKey(0)
    keys = iter(jax.random.split(key, 64))

    def linear_init(k, fan_in, fan_out):
        kw, kb = jax.random.split(k)
        bound = 1.0 / float(np.sqrt(fan_in))
        w = jax.random.uniform(kw, (fan_out, fan_in), minval=-bound, maxval=bound,
                               dtype=jnp.float32)
        b = jax.random.uniform(kb, (fan_out,), minval=-bound, maxval=bound,
                               dtype=jnp.float32)
        return w, b

    layer_dims = ([(dim_x, hidden_width)]
                  + [(hidden_width, hidden_width)] * hidden_depth
                  + [(hidden_width, dim_encoding)])
    enc_linears, enc_bns = [], []
    for idx, (din, dout) in enumerate(layer_dims):
        enc_linears.append(linear_init(next(keys), din, dout))
        if idx < len(layer_dims) - 1:     # every hidden Linear is followed by a BN
            kg, kb2, km, kv = jax.random.split(next(keys), 4)
            enc_bns.append((
                jax.random.uniform(kg, (dout,), minval=0.5, maxval=1.5, dtype=jnp.float32),
                jax.random.uniform(kb2, (dout,), minval=-0.3, maxval=0.3, dtype=jnp.float32),
                jax.random.uniform(km, (dout,), minval=-0.3, maxval=0.3, dtype=jnp.float32),
                jax.random.uniform(kv, (dout,), minval=0.5, maxval=1.5, dtype=jnp.float32),
            ))
    head_w, head_b = linear_init(next(keys), dim_encoding, 2 * num_bin)
    x = jax.random.normal(next(keys), (N, dim_x), dtype=jnp.float32)

    fwd = jax.jit(functools.partial(simulation_net_forward, num_bin=num_bin))
    probs, encoding = fwd(x, enc_linears, enc_bns, head_w, head_b)
    probs = jax.block_until_ready(probs)
    encoding = jax.block_until_ready(encoding)
    assert probs.shape == (N, 2, num_bin)
    assert encoding.shape == (N, dim_encoding)

    # ---- (a) bit-faithful jnp reference with the SAME folded/padded bf16 params ----
    wts_ref, bs_ref = fold_encoder_params(enc_linears, enc_bns)
    hw_ref, hb_ref = fold_head_params(head_w, head_b, num_bin)

    def faithful_ref(xv):
        h = xv.astype(jnp.float32)
        for l in range(len(wts_ref)):
            h = jnp.dot(h.astype(jnp.bfloat16), wts_ref[l],
                        preferred_element_type=jnp.float32) + bs_ref[l]
            if l < len(wts_ref) - 1:
                h = jnp.where(h > 0.0, h, jnp.exp(jnp.minimum(h, 0.0)) - 1.0)
        d = jnp.dot(h.astype(jnp.bfloat16), hw_ref,
                    preferred_element_type=jnp.float32) + hb_ref
        return h, 1.0 / (1.0 + jnp.exp(-d))

    f_enc, f_probs = jax.jit(faithful_ref)(x)
    np.testing.assert_allclose(np.asarray(encoding), np.asarray(f_enc),
                               atol=5e-4, rtol=5e-4)
    np.testing.assert_allclose(np.asarray(probs).reshape(N, -1), np.asarray(f_probs),
                               atol=5e-4, rtol=5e-4)

    # ---- (b) float64 numpy reference of the original PyTorch semantics (f32 params) ----
    def torch_semantics_ref():
        h = np.asarray(x, np.float64)
        for idx, (w, b) in enumerate(enc_linears):
            h = h @ np.asarray(w, np.float64).T + np.asarray(b, np.float64)
            if idx < len(enc_linears) - 1:
                g, bt, m, v = (np.asarray(t, np.float64) for t in enc_bns[idx])
                h = (h - m) / np.sqrt(v + _BN_EPS) * g + bt
                h = np.where(h > 0.0, h, np.exp(np.minimum(h, 0.0)) - 1.0)
        logits = h @ np.asarray(head_w, np.float64).T + np.asarray(head_b, np.float64)
        z = logits.reshape(-1, 2, num_bin)
        e = np.exp(z - z.max(axis=1, keepdims=True))
        return h, e / e.sum(axis=1, keepdims=True)

    ref_enc, ref_probs = torch_semantics_ref()
    # bf16 weights/activations through 10 chained layers -> loose tolerances here;
    # the tight check above pins the kernel against the bit-faithful reference.
    np.testing.assert_allclose(np.asarray(encoding), ref_enc, atol=5e-2, rtol=5e-2)
    np.testing.assert_allclose(np.asarray(probs), ref_probs, atol=3e-2)

    # Probabilities over the 2-way class axis must sum to 1.
    np.testing.assert_allclose(np.asarray(probs).sum(axis=1), 1.0, atol=1e-4)

    print("KERNEL_OK")
</pallas_src>

<mosaic_0001>
module attributes {stable_mosaic.version = 11 : i64} {
  func.func @_fused_kernel(%arg0: i32, %arg1: memref<16x24xf32, #tpu.memory_space<vmem>>, %arg2: memref<24x128xbf16, #tpu.memory_space<vmem>>, %arg3: memref<128x128xbf16, #tpu.memory_space<vmem>>, %arg4: memref<128x128xbf16, #tpu.memory_space<vmem>>, %arg5: memref<128x128xbf16, #tpu.memory_space<vmem>>, %arg6: memref<128x128xbf16, #tpu.memory_space<vmem>>, %arg7: memref<128x128xbf16, #tpu.memory_space<vmem>>, %arg8: memref<128x128xbf16, #tpu.memory_space<vmem>>, %arg9: memref<128x128xbf16, #tpu.memory_space<vmem>>, %arg10: memref<128x128xbf16, #tpu.memory_space<vmem>>, %arg11: memref<128x32xbf16, #tpu.memory_space<vmem>>, %arg12: memref<1x128xf32, #tpu.memory_space<vmem>>, %arg13: memref<1x128xf32, #tpu.memory_space<vmem>>, %arg14: memref<1x128xf32, #tpu.memory_space<vmem>>, %arg15: memref<1x128xf32, #tpu.memory_space<vmem>>, %arg16: memref<1x128xf32, #tpu.memory_space<vmem>>, %arg17: memref<1x128xf32, #tpu.memory_space<vmem>>, %arg18: memref<1x128xf32, #tpu.memory_space<vmem>>, %arg19: memref<1x128xf32, #tpu.memory_space<vmem>>, %arg20: memref<1x128xf32, #tpu.memory_space<vmem>>, %arg21: memref<1x32xf32, #tpu.memory_space<vmem>>, %arg22: memref<32x32xbf16, #tpu.memory_space<vmem>>, %arg23: memref<1x32xf32, #tpu.memory_space<vmem>>, %arg24: memref<16x32xf32, #tpu.memory_space<vmem>>, %arg25: memref<16x32xf32, #tpu.memory_space<vmem>>) attributes {dimension_semantics = [#tpu.dimension_semantics<parallel>], iteration_bounds = array<i64: 1>, scalar_prefetch = 0 : i64, scratch_operands = 0 : i64, tpu.core_type = #tpu.core_type<tc>, window_params = [{transform_indices = @transform_0, window_bounds = array<i64: 16, 24>}, {pipeline_mode = #tpu.pipeline_mode<synchronous>, transform_indices = @transform_1, window_bounds = array<i64: 24, 128>}, {pipeline_mode = #tpu.pipeline_mode<synchronous>, transform_indices = @transform_2, window_bounds = array<i64: 128, 128>}, {pipeline_mode = #tpu.pipeline_mode<synchronous>, transform_indices = @transform_3, window_bounds = array<i64: 128, 128>}, {pipeline_mode = #tpu.pipeline_mode<synchronous>, transform_indices = @transform_4, window_bounds = array<i64: 128, 128>}, {pipeline_mode = #tpu.pipeline_mode<synchronous>, transform_indices = @transform_5, window_bounds = array<i64: 128, 128>}, {pipeline_mode = #tpu.pipeline_mode<synchronous>, transform_indices = @transform_6, window_bounds = array<i64: 128, 128>}, {pipeline_mode = #tpu.pipeline_mode<synchronous>, transform_indices = @transform_7, window_bounds = array<i64: 128, 128>}, {pipeline_mode = #tpu.pipeline_mode<synchronous>, transform_indices = @transform_8, window_bounds = array<i64: 128, 128>}, {pipeline_mode = #tpu.pipeline_mode<synchronous>, transform_indices = @transform_9, window_bounds = array<i64: 128, 128>}, {pipeline_mode = #tpu.pipeline_mode<synchronous>, transform_indices = @transform_10, window_bounds = array<i64: 128, 32>}, {pipeline_mode = #tpu.pipeline_mode<synchronous>, transform_indices = @transform_11, window_bounds = array<i64: 1, 128>}, {pipeline_mode = #tpu.pipeline_mode<synchronous>, transform_indices = @transform_12, window_bounds = array<i64: 1, 128>}, {pipeline_mode = #tpu.pipeline_mode<synchronous>, transform_indices = @transform_13, window_bounds = array<i64: 1, 128>}, {pipeline_mode = #tpu.pipeline_mode<synchronous>, transform_indices = @transform_14, window_bounds = array<i64: 1, 128>}, {pipeline_mode = #tpu.pipeline_mode<synchronous>, transform_indices = @transform_15, window_bounds = array<i64: 1, 128>}, {pipeline_mode = #tpu.pipeline_mode<synchronous>, transform_indices = @transform_16, window_bounds = array<i64: 1, 128>}, {pipeline_mode = #tpu.pipeline_mode<synchronous>, transform_indices = @transform_17, window_bounds = array<i64: 1, 128>}, {pipeline_mode = #tpu.pipeline_mode<synchronous>, transform_indices = @transform_18, window_bounds = array<i64: 1, 128>}, {pipeline_mode = #tpu.pipeline_mode<synchronous>, transform_indices = @transform_19, window_bounds = array<i64: 1, 128>}, {pipeline_mode = #tpu.pipeline_mode<synchronous>, transform_indices = @transform_20, window_bounds = array<i64: 1, 32>}, {pipeline_mode = #tpu.pipeline_mode<synchronous>, transform_indices = @transform_21, window_bounds = array<i64: 32, 32>}, {pipeline_mode = #tpu.pipeline_mode<synchronous>, transform_indices = @transform_22, window_bounds = array<i64: 1, 32>}, {transform_indices = @transform_23, window_bounds = array<i64: 16, 32>}, {transform_indices = @transform_24, window_bounds = array<i64: 16, 32>}]} {
    %c0 = arith.constant 0 : index
    %c0_0 = arith.constant 0 : index
    %0 = vector.load %arg1[%c0, %c0_0] : memref<16x24xf32, #tpu.memory_space<vmem>>, vector<16x24xf32>
    %1 = arith.truncf %0 : vector<16x24xf32> to vector<16x24xbf16>
    %c0_1 = arith.constant 0 : index
    %c0_2 = arith.constant 0 : index
    %2 = vector.load %arg2[%c0_1, %c0_2] : memref<24x128xbf16, #tpu.memory_space<vmem>>, vector<24x128xbf16>
    %cst = arith.constant dense<0.000000e+00> : vector<16x128xf32>
    %3 = tpu.matmul %1, %2, %cst {dimension_numbers = #tpu.dot_dimension_numbers<[1], [0], [0], [1], [0, 0, 1, 1], [], []>} : vector<16x24xbf16>, vector<24x128xbf16>, vector<16x128xf32> -> vector<16x128xf32>
    %c0_3 = arith.constant 0 : index
    %c0_4 = arith.constant 0 : index
    %4 = vector.load %arg12[%c0_3, %c0_4] : memref<1x128xf32, #tpu.memory_space<vmem>>, vector<1x128xf32>
    %5 = vector.broadcast %4 : vector<1x128xf32> to vector<16x128xf32>
    %6 = arith.addf %3, %5 : vector<16x128xf32>
    %cst_5 = arith.constant 0.000000e+00 : f32
    %7 = vector.broadcast %cst_5 : f32 to vector<16x128xf32>
    %8 = arith.cmpf ogt, %6, %7 : vector<16x128xf32>
    %cst_6 = arith.constant 0.000000e+00 : f32
    %9 = vector.broadcast %cst_6 : f32 to vector<16x128xf32>
    %10 = arith.minimumf %6, %9 : vector<16x128xf32>
    %11 = math.exp %10 : vector<16x128xf32>
    %cst_7 = arith.constant 1.000000e+00 : f32
    %12 = vector.broadcast %cst_7 : f32 to vector<16x128xf32>
    %13 = arith.subf %11, %12 : vector<16x128xf32>
    %14 = arith.select %8, %6, %13 : vector<16x128xi1>, vector<16x128xf32>
    %15 = arith.truncf %14 : vector<16x128xf32> to vector<16x128xbf16>
    %c0_8 = arith.constant 0 : index
    %c0_9 = arith.constant 0 : index
    %16 = vector.load %arg3[%c0_8, %c0_9] : memref<128x128xbf16, #tpu.memory_space<vmem>>, vector<128x128xbf16>
    %cst_10 = arith.constant dense<0.000000e+00> : vector<16x128xf32>
    %17 = tpu.matmul %15, %16, %cst_10 {dimension_numbers = #tpu.dot_dimension_numbers<[1], [0], [0], [1], [0, 0, 1, 1], [], []>} : vector<16x128xbf16>, vector<128x128xbf16>, vector<16x128xf32> -> vector<16x128xf32>
    %c0_11 = arith.constant 0 : index
    %c0_12 = arith.constant 0 : index
    %18 = vector.load %arg13[%c0_11, %c0_12] : memref<1x128xf32, #tpu.memory_space<vmem>>, vector<1x128xf32>
    %19 = vector.broadcast %18 : vector<1x128xf32> to vector<16x128xf32>
    %20 = arith.addf %17, %19 : vector<16x128xf32>
    %cst_13 = arith.constant 0.000000e+00 : f32
    %21 = vector.broadcast %cst_13 : f32 to vector<16x128xf32>
    %22 = arith.cmpf ogt, %20, %21 : vector<16x128xf32>
    %cst_14 = arith.constant 0.000000e+00 : f32
    %23 = vector.broadcast %cst_14 : f32 to vector<16x128xf32>
    %24 = arith.minimumf %20, %23 : vector<16x128xf32>
    %25 = math.exp %24 : vector<16x128xf32>
    %cst_15 = arith.constant 1.000000e+00 : f32
    %26 = vector.broadcast %cst_15 : f32 to vector<16x128xf32>
    %27 = arith.subf %25, %26 : vector<16x128xf32>
    %28 = arith.select %22, %20, %27 : vector<16x128xi1>, vector<16x128xf32>
    %29 = arith.truncf %28 : vector<16x128xf32> to vector<16x128xbf16>
    %c0_16 = arith.constant 0 : index
    %c0_17 = arith.constant 0 : index
    %30 = vector.load %arg4[%c0_16, %c0_17] : memref<128x128xbf16, #tpu.memory_space<vmem>>, vector<128x128xbf16>
    %cst_18 = arith.constant dense<0.000000e+00> : vector<16x128xf32>
    %31 = tpu.matmul %29, %30, %cst_18 {dimension_numbers = #tpu.dot_dimension_numbers<[1], [0], [0], [1], [0, 0, 1, 1], [], []>} : vector<16x128xbf16>, vector<128x128xbf16>, vector<16x128xf32> -> vector<16x128xf32>
    %c0_19 = arith.constant 0 : index
    %c0_20 = arith.constant 0 : index
    %32 = vector.load %arg14[%c0_19, %c0_20] : memref<1x128xf32, #tpu.memory_space<vmem>>, vector<1x128xf32>
    %33 = vector.broadcast %32 : vector<1x128xf32> to vector<16x128xf32>
    %34 = arith.addf %31, %33 : vector<16x128xf32>
    %cst_21 = arith.constant 0.000000e+00 : f32
    %35 = vector.broadcast %cst_21 : f32 to vector<16x128xf32>
    %36 = arith.cmpf ogt, %34, %35 : vector<16x128xf32>
    %cst_22 = arith.constant 0.000000e+00 : f32
    %37 = vector.broadcast %cst_22 : f32 to vector<16x128xf32>
    %38 = arith.minimumf %34, %37 : vector<16x128xf32>
    %39 = math.exp %38 : vector<16x128xf32>
    %cst_23 = arith.constant 1.000000e+00 : f32
    %40 = vector.broadcast %cst_23 : f32 to vector<16x128xf32>
    %41 = arith.subf %39, %40 : vector<16x128xf32>
    %42 = arith.select %36, %34, %41 : vector<16x128xi1>, vector<16x128xf32>
    %43 = arith.truncf %42 : vector<16x128xf32> to vector<16x128xbf16>
    %c0_24 = arith.constant 0 : index
    %c0_25 = arith.constant 0 : index
    %44 = vector.load %arg5[%c0_24, %c0_25] : memref<128x128xbf16, #tpu.memory_space<vmem>>, vector<128x128xbf16>
    %cst_26 = arith.constant dense<0.000000e+00> : vector<16x128xf32>
    %45 = tpu.matmul %43, %44, %cst_26 {dimension_numbers = #tpu.dot_dimension_numbers<[1], [0], [0], [1], [0, 0, 1, 1], [], []>} : vector<16x128xbf16>, vector<128x128xbf16>, vector<16x128xf32> -> vector<16x128xf32>
    %c0_27 = arith.constant 0 : index
    %c0_28 = arith.constant 0 : index
    %46 = vector.load %arg15[%c0_27, %c0_28] : memref<1x128xf32, #tpu.memory_space<vmem>>, vector<1x128xf32>
    %47 = vector.broadcast %46 : vector<1x128xf32> to vector<16x128xf32>
    %48 = arith.addf %45, %47 : vector<16x128xf32>
    %cst_29 = arith.constant 0.000000e+00 : f32
    %49 = vector.broadcast %cst_29 : f32 to vector<16x128xf32>
    %50 = arith.cmpf ogt, %48, %49 : vector<16x128xf32>
    %cst_30 = arith.constant 0.000000e+00 : f32
    %51 = vector.broadcast %cst_30 : f32 to vector<16x128xf32>
    %52 = arith.minimumf %48, %51 : vector<16x128xf32>
    %53 = math.exp %52 : vector<16x128xf32>
    %cst_31 = arith.constant 1.000000e+00 : f32
    %54 = vector.broadcast %cst_31 : f32 to vector<16x128xf32>
    %55 = arith.subf %53, %54 : vector<16x128xf32>
    %56 = arith.select %50, %48, %55 : vector<16x128xi1>, vector<16x128xf32>
    %57 = arith.truncf %56 : vector<16x128xf32> to vector<16x128xbf16>
    %c0_32 = arith.constant 0 : index
    %c0_33 = arith.constant 0 : index
    %58 = vector.load %arg6[%c0_32, %c0_33] : memref<128x128xbf16, #tpu.memory_space<vmem>>, vector<128x128xbf16>
    %cst_34 = arith.constant dense<0.000000e+00> : vector<16x128xf32>
    %59 = tpu.matmul %57, %58, %cst_34 {dimension_numbers = #tpu.dot_dimension_numbers<[1], [0], [0], [1], [0, 0, 1, 1], [], []>} : vector<16x128xbf16>, vector<128x128xbf16>, vector<16x128xf32> -> vector<16x128xf32>
    %c0_35 = arith.constant 0 : index
    %c0_36 = arith.constant 0 : index
    %60 = vector.load %arg16[%c0_35, %c0_36] : memref<1x128xf32, #tpu.memory_space<vmem>>, vector<1x128xf32>
    %61 = vector.broadcast %60 : vector<1x128xf32> to vector<16x128xf32>
    %62 = arith.addf %59, %61 : vector<16x128xf32>
    %cst_37 = arith.constant 0.000000e+00 : f32
    %63 = vector.broadcast %cst_37 : f32 to vector<16x128xf32>
    %64 = arith.cmpf ogt, %62, %63 : vector<16x128xf32>
    %cst_38 = arith.constant 0.000000e+00 : f32
    %65 = vector.broadcast %cst_38 : f32 to vector<16x128xf32>
    %66 = arith.minimumf %62, %65 : vector<16x128xf32>
    %67 = math.exp %66 : vector<16x128xf32>
    %cst_39 = arith.constant 1.000000e+00 : f32
    %68 = vector.broadcast %cst_39 : f32 to vector<16x128xf32>
    %69 = arith.subf %67, %68 : vector<16x128xf32>
    %70 = arith.select %64, %62, %69 : vector<16x128xi1>, vector<16x128xf32>
    %71 = arith.truncf %70 : vector<16x128xf32> to vector<16x128xbf16>
    %c0_40 = arith.constant 0 : index
    %c0_41 = arith.constant 0 : index
    %72 = vector.load %arg7[%c0_40, %c0_41] : memref<128x128xbf16, #tpu.memory_space<vmem>>, vector<128x128xbf16>
    %cst_42 = arith.constant dense<0.000000e+00> : vector<16x128xf32>
    %73 = tpu.matmul %71, %72, %cst_42 {dimension_numbers = #tpu.dot_dimension_numbers<[1], [0], [0], [1], [0, 0, 1, 1], [], []>} : vector<16x128xbf16>, vector<128x128xbf16>, vector<16x128xf32> -> vector<16x128xf32>
    %c0_43 = arith.constant 0 : index
    %c0_44 = arith.constant 0 : index
    %74 = vector.load %arg17[%c0_43, %c0_44] : memref<1x128xf32, #tpu.memory_space<vmem>>, vector<1x128xf32>
    %75 = vector.broadcast %74 : vector<1x128xf32> to vector<16x128xf32>
    %76 = arith.addf %73, %75 : vector<16x128xf32>
    %cst_45 = arith.constant 0.000000e+00 : f32
    %77 = vector.broadcast %cst_45 : f32 to vector<16x128xf32>
    %78 = arith.cmpf ogt, %76, %77 : vector<16x128xf32>
    %cst_46 = arith.constant 0.000000e+00 : f32
    %79 = vector.broadcast %cst_46 : f32 to vector<16x128xf32>
    %80 = arith.minimumf %76, %79 : vector<16x128xf32>
    %81 = math.exp %80 : vector<16x128xf32>
    %cst_47 = arith.constant 1.000000e+00 : f32
    %82 = vector.broadcast %cst_47 : f32 to vector<16x128xf32>
    %83 = arith.subf %81, %82 : vector<16x128xf32>
    %84 = arith.select %78, %76, %83 : vector<16x128xi1>, vector<16x128xf32>
    %85 = arith.truncf %84 : vector<16x128xf32> to vector<16x128xbf16>
    %c0_48 = arith.constant 0 : index
    %c0_49 = arith.constant 0 : index
    %86 = vector.load %arg8[%c0_48, %c0_49] : memref<128x128xbf16, #tpu.memory_space<vmem>>, vector<128x128xbf16>
    %cst_50 = arith.constant dense<0.000000e+00> : vector<16x128xf32>
    %87 = tpu.matmul %85, %86, %cst_50 {dimension_numbers = #tpu.dot_dimension_numbers<[1], [0], [0], [1], [0, 0, 1, 1], [], []>} : vector<16x128xbf16>, vector<128x128xbf16>, vector<16x128xf32> -> vector<16x128xf32>
    %c0_51 = arith.constant 0 : index
    %c0_52 = arith.constant 0 : index
    %88 = vector.load %arg18[%c0_51, %c0_52] : memref<1x128xf32, #tpu.memory_space<vmem>>, vector<1x128xf32>
    %89 = vector.broadcast %88 : vector<1x128xf32> to vector<16x128xf32>
    %90 = arith.addf %87, %89 : vector<16x128xf32>
    %cst_53 = arith.constant 0.000000e+00 : f32
    %91 = vector.broadcast %cst_53 : f32 to vector<16x128xf32>
    %92 = arith.cmpf ogt, %90, %91 : vector<16x128xf32>
    %cst_54 = arith.constant 0.000000e+00 : f32
    %93 = vector.broadcast %cst_54 : f32 to vector<16x128xf32>
    %94 = arith.minimumf %90, %93 : vector<16x128xf32>
    %95 = math.exp %94 : vector<16x128xf32>
    %cst_55 = arith.constant 1.000000e+00 : f32
    %96 = vector.broadcast %cst_55 : f32 to vector<16x128xf32>
    %97 = arith.subf %95, %96 : vector<16x128xf32>
    %98 = arith.select %92, %90, %97 : vector<16x128xi1>, vector<16x128xf32>
    %99 = arith.truncf %98 : vector<16x128xf32> to vector<16x128xbf16>
    %c0_56 = arith.constant 0 : index
    %c0_57 = arith.constant 0 : index
    %100 = vector.load %arg9[%c0_56, %c0_57] : memref<128x128xbf16, #tpu.memory_space<vmem>>, vector<128x128xbf16>
    %cst_58 = arith.constant dense<0.000000e+00> : vector<16x128xf32>
    %101 = tpu.matmul %99, %100, %cst_58 {dimension_numbers = #tpu.dot_dimension_numbers<[1], [0], [0], [1], [0, 0, 1, 1], [], []>} : vector<16x128xbf16>, vector<128x128xbf16>, vector<16x128xf32> -> vector<16x128xf32>
    %c0_59 = arith.constant 0 : index
    %c0_60 = arith.constant 0 : index
    %102 = vector.load %arg19[%c0_59, %c0_60] : memref<1x128xf32, #tpu.memory_space<vmem>>, vector<1x128xf32>
    %103 = vector.broadcast %102 : vector<1x128xf32> to vector<16x128xf32>
    %104 = arith.addf %101, %103 : vector<16x128xf32>
    %cst_61 = arith.constant 0.000000e+00 : f32
    %105 = vector.broadcast %cst_61 : f32 to vector<16x128xf32>
    %106 = arith.cmpf ogt, %104, %105 : vector<16x128xf32>
    %cst_62 = arith.constant 0.000000e+00 : f32
    %107 = vector.broadcast %cst_62 : f32 to vector<16x128xf32>
    %108 = arith.minimumf %104, %107 : vector<16x128xf32>
    %109 = math.exp %108 : vector<16x128xf32>
    %cst_63 = arith.constant 1.000000e+00 : f32
    %110 = vector.broadcast %cst_63 : f32 to vector<16x128xf32>
    %111 = arith.subf %109, %110 : vector<16x128xf32>
    %112 = arith.select %106, %104, %111 : vector<16x128xi1>, vector<16x128xf32>
    %113 = arith.truncf %112 : vector<16x128xf32> to vector<16x128xbf16>
    %c0_64 = arith.constant 0 : index
    %c0_65 = arith.constant 0 : index
    %114 = vector.load %arg10[%c0_64, %c0_65] : memref<128x128xbf16, #tpu.memory_space<vmem>>, vector<128x128xbf16>
    %cst_66 = arith.constant dense<0.000000e+00> : vector<16x128xf32>
    %115 = tpu.matmul %113, %114, %cst_66 {dimension_numbers = #tpu.dot_dimension_numbers<[1], [0], [0], [1], [0, 0, 1, 1], [], []>} : vector<16x128xbf16>, vector<128x128xbf16>, vector<16x128xf32> -> vector<16x128xf32>
    %c0_67 = arith.constant 0 : index
    %c0_68 = arith.constant 0 : index
    %116 = vector.load %arg20[%c0_67, %c0_68] : memref<1x128xf32, #tpu.memory_space<vmem>>, vector<1x128xf32>
    %117 = vector.broadcast %116 : vector<1x128xf32> to vector<16x128xf32>
    %118 = arith.addf %115, %117 : vector<16x128xf32>
    %cst_69 = arith.constant 0.000000e+00 : f32
    %119 = vector.broadcast %cst_69 : f32 to vector<16x128xf32>
    %120 = arith.cmpf ogt, %118, %119 : vector<16x128xf32>
    %cst_70 = arith.constant 0.000000e+00 : f32
    %121 = vector.broadcast %cst_70 : f32 to vector<16x128xf32>
    %122 = arith.minimumf %118, %121 : vector<16x128xf32>
    %123 = math.exp %122 : vector<16x128xf32>
    %cst_71 = arith.constant 1.000000e+00 : f32
    %124 = vector.broadcast %cst_71 : f32 to vector<16x128xf32>
    %125 = arith.subf %123, %124 : vector<16x128xf32>
    %126 = arith.select %120, %118, %125 : vector<16x128xi1>, vector<16x128xf32>
    %127 = arith.truncf %126 : vector<16x128xf32> to vector<16x128xbf16>
    %c0_72 = arith.constant 0 : index
    %c0_73 = arith.constant 0 : index
    %128 = vector.load %arg11[%c0_72, %c0_73] : memref<128x32xbf16, #tpu.memory_space<vmem>>, vector<128x32xbf16>
    %cst_74 = arith.constant dense<0.000000e+00> : vector<16x32xf32>
    %129 = tpu.matmul %127, %128, %cst_74 {dimension_numbers = #tpu.dot_dimension_numbers<[1], [0], [0], [1], [0, 0, 1, 1], [], []>} : vector<16x128xbf16>, vector<128x32xbf16>, vector<16x32xf32> -> vector<16x32xf32>
    %c0_75 = arith.constant 0 : index
    %c0_76 = arith.constant 0 : index
    %130 = vector.load %arg21[%c0_75, %c0_76] : memref<1x32xf32, #tpu.memory_space<vmem>>, vector<1x32xf32>
    %131 = vector.broadcast %130 : vector<1x32xf32> to vector<16x32xf32>
    %132 = arith.addf %129, %131 : vector<16x32xf32>
    %c0_77 = arith.constant 0 : index
    %c0_78 = arith.constant 0 : index
    %133 = vector.load %arg24[%c0_77, %c0_78] : memref<16x32xf32, #tpu.memory_space<vmem>>, vector<16x32xf32>
    tpu.vector_store %arg24[%c0_77, %c0_78], %132 {strides = array<i32>} : memref<16x32xf32, #tpu.memory_space<vmem>>, vector<16x32xf32>,
    %134 = arith.truncf %132 : vector<16x32xf32> to vector<16x32xbf16>
    %c0_79 = arith.constant 0 : index
    %c0_80 = arith.constant 0 : index
    %135 = vector.load %arg22[%c0_79, %c0_80] : memref<32x32xbf16, #tpu.memory_space<vmem>>, vector<32x32xbf16>
    %cst_81 = arith.constant dense<0.000000e+00> : vector<16x32xf32>
    %136 = tpu.matmul %134, %135, %cst_81 {dimension_numbers = #tpu.dot_dimension_numbers<[1], [0], [0], [1], [0, 0, 1, 1], [], []>} : vector<16x32xbf16>, vector<32x32xbf16>, vector<16x32xf32> -> vector<16x32xf32>
    %c0_82 = arith.constant 0 : index
    %c0_83 = arith.constant 0 : index
    %137 = vector.load %arg23[%c0_82, %c0_83] : memref<1x32xf32, #tpu.memory_space<vmem>>, vector<1x32xf32>
    %138 = vector.broadcast %137 : vector<1x32xf32> to vector<16x32xf32>
    %139 = arith.addf %136, %138 : vector<16x32xf32>
    %cst_84 = arith.constant 0.000000e+00 : f32
    %140 = vector.broadcast %cst_84 : f32 to vector<16x32xf32>
    %141 = arith.subf %140, %139 : vector<16x32xf32>
    %142 = math.exp %141 : vector<16x32xf32>
    %cst_85 = arith.constant 1.000000e+00 : f32
    %143 = vector.broadcast %cst_85 : f32 to vector<16x32xf32>
    %144 = arith.addf %143, %142 : vector<16x32xf32>
    %cst_86 = arith.constant 1.000000e+00 : f32
    %145 = vector.broadcast %cst_86 : f32 to vector<16x32xf32>
    %146 = arith.divf %145, %144 : vector<16x32xf32>
    %c0_87 = arith.constant 0 : index
    %c0_88 = arith.constant 0 : index
    %147 = vector.load %arg25[%c0_87, %c0_88] : memref<16x32xf32, #tpu.memory_space<vmem>>, vector<16x32xf32>
    tpu.vector_store %arg25[%c0_87, %c0_88], %146 {strides = array<i32>} : memref<16x32xf32, #tpu.memory_space<vmem>>, vector<16x32xf32>,
    return
  }
  func.func @transform_0(%arg0: i32) -> (i32, i32) {
    %c0_i32 = arith.constant 0 : i32
    %c0_i32_0 = arith.constant 0 : i32
    return %arg0, %c0_i32 : i32, i32
  }
  func.func @transform_1(%arg0: i32) -> (i32, i32) {
    %c0_i32 = arith.constant 0 : i32
    %c0_i32_0 = arith.constant 0 : i32
    %c0_i32_1 = arith.constant 0 : i32
    return %c0_i32, %c0_i32_0 : i32, i32
  }
  func.func @transform_2(%arg0: i32) -> (i32, i32) {
    %c0_i32 = arith.constant 0 : i32
    %c0_i32_0 = arith.constant 0 : i32
    %c0_i32_1 = arith.constant 0 : i32
    return %c0_i32, %c0_i32_0 : i32, i32
  }
  func.func @transform_3(%arg0: i32) -> (i32, i32) {
    %c0_i32 = arith.constant 0 : i32
    %c0_i32_0 = arith.constant 0 : i32
    %c0_i32_1 = arith.constant 0 : i32
    return %c0_i32, %c0_i32_0 : i32, i32
  }
  func.func @transform_4(%arg0: i32) -> (i32, i32) {
    %c0_i32 = arith.constant 0 : i32
    %c0_i32_0 = arith.constant 0 : i32
    %c0_i32_1 = arith.constant 0 : i32
    return %c0_i32, %c0_i32_0 : i32, i32
  }
  func.func @transform_5(%arg0: i32) -> (i32, i32) {
    %c0_i32 = arith.constant 0 : i32
    %c0_i32_0 = arith.constant 0 : i32
    %c0_i32_1 = arith.constant 0 : i32
    return %c0_i32, %c0_i32_0 : i32, i32
  }
  func.func @transform_6(%arg0: i32) -> (i32, i32) {
    %c0_i32 = arith.constant 0 : i32
    %c0_i32_0 = arith.constant 0 : i32
    %c0_i32_1 = arith.constant 0 : i32
    return %c0_i32, %c0_i32_0 : i32, i32
  }
  func.func @transform_7(%arg0: i32) -> (i32, i32) {
    %c0_i32 = arith.constant 0 : i32
    %c0_i32_0 = arith.constant 0 : i32
    %c0_i32_1 = arith.constant 0 : i32
    return %c0_i32, %c0_i32_0 : i32, i32
  }
  func.func @transform_8(%arg0: i32) -> (i32, i32) {
    %c0_i32 = arith.constant 0 : i32
    %c0_i32_0 = arith.constant 0 : i32
    %c0_i32_1 = arith.constant 0 : i32
    return %c0_i32, %c0_i32_0 : i32, i32
  }
  func.func @transform_9(%arg0: i32) -> (i32, i32) {
    %c0_i32 = arith.constant 0 : i32
    %c0_i32_0 = arith.constant 0 : i32
    %c0_i32_1 = arith.constant 0 : i32
    return %c0_i32, %c0_i32_0 : i32, i32
  }
  func.func @transform_10(%arg0: i32) -> (i32, i32) {
    %c0_i32 = arith.constant 0 : i32
    %c0_i32_0 = arith.constant 0 : i32
    %c0_i32_1 = arith.constant 0 : i32
    return %c0_i32, %c0_i32_0 : i32, i32
  }
  func.func @transform_11(%arg0: i32) -> (i32, i32) {
    %c0_i32 = arith.constant 0 : i32
    %c0_i32_0 = arith.constant 0 : i32
    %c0_i32_1 = arith.constant 0 : i32
    return %c0_i32, %c0_i32_0 : i32, i32
  }
  func.func @transform_12(%arg0: i32) -> (i32, i32) {
    %c0_i32 = arith.constant 0 : i32
    %c0_i32_0 = arith.constant 0 : i32
    %c0_i32_1 = arith.constant 0 : i32
    return %c0_i32, %c0_i32_0 : i32, i32
  }
  func.func @transform_13(%arg0: i32) -> (i32, i32) {
    %c0_i32 = arith.constant 0 : i32
    %c0_i32_0 = arith.constant 0 : i32
    %c0_i32_1 = arith.constant 0 : i32
    return %c0_i32, %c0_i32_0 : i32, i32
  }
  func.func @transform_14(%arg0: i32) -> (i32, i32) {
    %c0_i32 = arith.constant 0 : i32
    %c0_i32_0 = arith.constant 0 : i32
    %c0_i32_1 = arith.constant 0 : i32
    return %c0_i32, %c0_i32_0 : i32, i32
  }
  func.func @transform_15(%arg0: i32) -> (i32, i32) {
    %c0_i32 = arith.constant 0 : i32
    %c0_i32_0 = arith.constant 0 : i32
    %c0_i32_1 = arith.constant 0 : i32
    return %c0_i32, %c0_i32_0 : i32, i32
  }
  func.func @transform_16(%arg0: i32) -> (i32, i32) {
    %c0_i32 = arith.constant 0 : i32
    %c0_i32_0 = arith.constant 0 : i32
    %c0_i32_1 = arith.constant 0 : i32
    return %c0_i32, %c0_i32_0 : i32, i32
  }
  func.func @transform_17(%arg0: i32) -> (i32, i32) {
    %c0_i32 = arith.constant 0 : i32
    %c0_i32_0 = arith.constant 0 : i32
    %c0_i32_1 = arith.constant 0 : i32
    return %c0_i32, %c0_i32_0 : i32, i32
  }
  func.func @transform_18(%arg0: i32) -> (i32, i32) {
    %c0_i32 = arith.constant 0 : i32
    %c0_i32_0 = arith.constant 0 : i32
    %c0_i32_1 = arith.constant 0 : i32
    return %c0_i32, %c0_i32_0 : i32, i32
  }
  func.func @transform_19(%arg0: i32) -> (i32, i32) {
    %c0_i32 = arith.constant 0 : i32
    %c0_i32_0 = arith.constant 0 : i32
    %c0_i32_1 = arith.constant 0 : i32
    return %c0_i32, %c0_i32_0 : i32, i32
  }
  func.func @transform_20(%arg0: i32) -> (i32, i32) {
    %c0_i32 = arith.constant 0 : i32
    %c0_i32_0 = arith.constant 0 : i32
    %c0_i32_1 = arith.constant 0 : i32
    return %c0_i32, %c0_i32_0 : i32, i32
  }
  func.func @transform_21(%arg0: i32) -> (i32, i32) {
    %c0_i32 = arith.constant 0 : i32
    %c0_i32_0 = arith.constant 0 : i32
    %c0_i32_1 = arith.constant 0 : i32
    return %c0_i32, %c0_i32_0 : i32, i32
  }
  func.func @transform_22(%arg0: i32) -> (i32, i32) {
    %c0_i32 = arith.constant 0 : i32
    %c0_i32_0 = arith.constant 0 : i32
    %c0_i32_1 = arith.constant 0 : i32
    return %c0_i32, %c0_i32_0 : i32, i32
  }
  func.func @transform_23(%arg0: i32) -> (i32, i32) {
    %c0_i32 = arith.constant 0 : i32
    %c0_i32_0 = arith.constant 0 : i32
    return %arg0, %c0_i32 : i32, i32
  }
  func.func @transform_24(%arg0: i32) -> (i32, i32) {
    %c0_i32 = arith.constant 0 : i32
    %c0_i32_0 = arith.constant 0 : i32
    return %arg0, %c0_i32 : i32, i32
  }
}

</mosaic_0001>

<llo_original>
// kernel: simulation_net_forward.1
$region0: #{simulation_net_forward.1}
  #allocation0 [shape = 'u32[]', space=smem, size = 0x4, offset = 0x4, fixed_abs, tag = 'smem constant byte address 0x4 - core index']
  #allocation1 [shape = 'u32[144,128]{1,0:T(1,128)}', space=vmem, size = 0x12000, scoped, tag = 'internal scratch']
  %s0 = inlined_call_operand.vmem [shape: f32[16,24], index: 0, kind: input, shape index: {}]
  %s1 = inlined_call_operand.vmem [shape: bf16[24,128], index: 1, kind: input, shape index: {}]
  %s2 = inlined_call_operand.vmem [shape: bf16[128,128], index: 2, kind: input, shape index: {}]
  %s3 = inlined_call_operand.vmem [shape: bf16[128,128], index: 3, kind: input, shape index: {}]
  %s4 = inlined_call_operand.vmem [shape: bf16[128,128], index: 4, kind: input, shape index: {}]
  %s5 = inlined_call_operand.vmem [shape: bf16[128,128], index: 5, kind: input, shape index: {}]
  %s6 = inlined_call_operand.vmem [shape: bf16[128,128], index: 6, kind: input, shape index: {}]
  %s7 = inlined_call_operand.vmem [shape: bf16[128,128], index: 7, kind: input, shape index: {}]
  %s8 = inlined_call_operand.vmem [shape: bf16[128,128], index: 8, kind: input, shape index: {}]
  %s9 = inlined_call_operand.vmem [shape: bf16[128,128], index: 9, kind: input, shape index: {}]
  %s10 = inlined_call_operand.vmem [shape: bf16[128,32], index: 10, kind: input, shape index: {}]
  %s11 = inlined_call_operand.vmem [shape: f32[1,128], index: 11, kind: input, shape index: {}]
  %s12 = inlined_call_operand.vmem [shape: f32[1,128], index: 12, kind: input, shape index: {}]
  %s13 = inlined_call_operand.vmem [shape: f32[1,128], index: 13, kind: input, shape index: {}]
  %s14 = inlined_call_operand.vmem [shape: f32[1,128], index: 14, kind: input, shape index: {}]
  %s15 = inlined_call_operand.vmem [shape: f32[1,128], index: 15, kind: input, shape index: {}]
  %s16 = inlined_call_operand.vmem [shape: f32[1,128], index: 16, kind: input, shape index: {}]
  %s17 = inlined_call_operand.vmem [shape: f32[1,128], index: 17, kind: input, shape index: {}]
  %s18 = inlined_call_operand.vmem [shape: f32[1,128], index: 18, kind: input, shape index: {}]
  %s19 = inlined_call_operand.vmem [shape: f32[1,128], index: 19, kind: input, shape index: {}]
  %s20 = inlined_call_operand.vmem [shape: f32[1,32], index: 20, kind: input, shape index: {}]
  %s21 = inlined_call_operand.vmem [shape: bf16[32,32], index: 21, kind: input, shape index: {}]
  %s22 = inlined_call_operand.vmem [shape: f32[1,32], index: 22, kind: input, shape index: {}]
  %s23 = inlined_call_operand.hbm [shape: f32[16,32], index: 23, kind: output, shape index: {0}]
  %s24 = inlined_call_operand.vmem [shape: f32[16,32], index: 24, kind: output, shape index: {1}]
  %25 = xla_tuple %s23, %s24
  %s26 = sld [smem:[#allocation0]]
  $region110: #{simulation_net_forward.1} parent=0
    _
  %s28 = ssub.s32 1, %s26
  %s29 = scalar_select 0, %s28, %s26
  $region1: #{simulation_net_forward.1} parent=0
    #allocation2 [shape = 'u8[8192]{0}', space=vmem, size = 0x2000, scoped, tag = 'output window, operand 0, single buffered']
    #allocation3 [shape = 's32[1]{0}', space=sflag, size = 0x4, scoped, tag = 'scoped memory for simulation_net_forward.1']
    %30 = vsyncpa [#allocation3], 0
    // Predicated region
    $region2: #{simulation_net_forward.1} parent=1 // pred_check
      _
    $region3: #{simulation_net_forward.1} parent=1 // pred_check_branch
      %32 = sbr.rel (0) target = $region5
    $region4: #{simulation_net_forward.1} parent=1 // pred_region
      _
    $region5: #{simulation_net_forward.1} parent=1 // pred_fallthru
      _
    // Predicated region
    $region6: #{simulation_net_forward.1} parent=1 // pred_check
      _
    $region7: #{simulation_net_forward.1} parent=1 // pred_check_branch
      %34 = sbr.rel (0) target = $region9
    $region8: #{simulation_net_forward.1} parent=1 // pred_region
      _
    $region9: #{simulation_net_forward.1} parent=1 // pred_fallthru
      _
    // Predicated region
    $region10: #{simulation_net_forward.1} parent=1 // pred_check
      _
    $region11: #{simulation_net_forward.1} parent=1 // pred_check_branch
      %36 = sbr.rel (0) target = $region13
    $region12: #{simulation_net_forward.1} parent=1 // pred_region
      _
    $region13: #{simulation_net_forward.1} parent=1 // pred_fallthru
      _
    // Predicated region
    $region14: #{simulation_net_forward.1} parent=1 // pred_check
      _
    $region15: #{simulation_net_forward.1} parent=1 // pred_check_branch
      %38 = sbr.rel (0) target = $region17
    $region16: #{simulation_net_forward.1} parent=1 // pred_region
      _
    $region17: #{simulation_net_forward.1} parent=1 // pred_fallthru
      _
    // Predicated region
    $region18: #{simulation_net_forward.1} parent=1 // pred_check
      _
    $region19: #{simulation_net_forward.1} parent=1 // pred_check_branch
      %40 = sbr.rel (0) target = $region21
    $region20: #{simulation_net_forward.1} parent=1 // pred_region
      _
    $region21: #{simulation_net_forward.1} parent=1 // pred_fallthru
      _
    // Predicated region
    $region22: #{simulation_net_forward.1} parent=1 // pred_check
      _
    $region23: #{simulation_net_forward.1} parent=1 // pred_check_branch
      %42 = sbr.rel (0) target = $region25
    $region24: #{simulation_net_forward.1} parent=1 // pred_region
      _
    $region25: #{simulation_net_forward.1} parent=1 // pred_fallthru
      _
    // Predicated region
    $region26: #{simulation_net_forward.1} parent=1 // pred_check
      _
    $region27: #{simulation_net_forward.1} parent=1 // pred_check_branch
      %44 = sbr.rel (0) target = $region29
    $region28: #{simulation_net_forward.1} parent=1 // pred_region
      _
    $region29: #{simulation_net_forward.1} parent=1 // pred_fallthru
      _
    // Predicated region
    $region30: #{simulation_net_forward.1} parent=1 // pred_check
      _
    $region31: #{simulation_net_forward.1} parent=1 // pred_check_branch
      %46 = sbr.rel (0) target = $region33
    $region32: #{simulation_net_forward.1} parent=1 // pred_region
      _
    $region33: #{simulation_net_forward.1} parent=1 // pred_fallthru
      _
    // Predicated region
    $region34: #{simulation_net_forward.1} parent=1 // pred_check
      _
    $region35: #{simulation_net_forward.1} parent=1 // pred_check_branch
      %48 = sbr.rel (0) target = $region37
    $region36: #{simulation_net_forward.1} parent=1 // pred_region
      _
    $region37: #{simulation_net_forward.1} parent=1 // pred_fallthru
      _
    // Predicated region
    $region38: #{simulation_net_forward.1} parent=1 // pred_check
      _
    $region39: #{simulation_net_forward.1} parent=1 // pred_check_branch
      %50 = sbr.rel (0) target = $region41
    $region40: #{simulation_net_forward.1} parent=1 // pred_region
      _
    $region41: #{simulation_net_forward.1} parent=1 // pred_fallthru
      _
    // Predicated region
    $region42: #{simulation_net_forward.1} parent=1 // pred_check
      _
    $region43: #{simulation_net_forward.1} parent=1 // pred_check_branch
      %52 = sbr.rel (0) target = $region45
    $region44: #{simulation_net_forward.1} parent=1 // pred_region
      _
    $region45: #{simulation_net_forward.1} parent=1 // pred_fallthru
      _
    // Predicated region
    $region46: #{simulation_net_forward.1} parent=1 // pred_check
      _
    $region47: #{simulation_net_forward.1} parent=1 // pred_check_branch
      %54 = sbr.rel (0) target = $region49
    $region48: #{simulation_net_forward.1} parent=1 // pred_region
      _
    $region49: #{simulation_net_forward.1} parent=1 // pred_fallthru
      _
    // Predicated region
    $region50: #{simulation_net_forward.1} parent=1 // pred_check
      _
    $region51: #{simulation_net_forward.1} parent=1 // pred_check_branch
      %56 = sbr.rel (0) target = $region53
    $region52: #{simulation_net_forward.1} parent=1 // pred_region
      _
    $region53: #{simulation_net_forward.1} parent=1 // pred_fallthru
      _
    // Predicated region
    $region54: #{simulation_net_forward.1} parent=1 // pred_check
      _
    $region55: #{simulation_net_forward.1} parent=1 // pred_check_branch
      %58 = sbr.rel (0) target = $region57
    $region56: #{simulation_net_forward.1} parent=1 // pred_region
      _
    $region57: #{simulation_net_forward.1} parent=1 // pred_fallthru
      _
    // Predicated region
    $region58: #{simulation_net_forward.1} parent=1 // pred_check
      _
    $region59: #{simulation_net_forward.1} parent=1 // pred_check_branch
      %60 = sbr.rel (0) target = $region61
    $region60: #{simulation_net_forward.1} parent=1 // pred_region
      _
    $region61: #{simulation_net_forward.1} parent=1 // pred_fallthru
      _
    // Predicated region
    $region62: #{simulation_net_forward.1} parent=1 // pred_check
      _
    $region63: #{simulation_net_forward.1} parent=1 // pred_check_branch
      %62 = sbr.rel (0) target = $region65
    $region64: #{simulation_net_forward.1} parent=1 // pred_region
      _
    $region65: #{simulation_net_forward.1} parent=1 // pred_fallthru
      _
    // Predicated region
    $region66: #{simulation_net_forward.1} parent=1 // pred_check
      _
    $region67: #{simulation_net_forward.1} parent=1 // pred_check_branch
      %64 = sbr.rel (0) target = $region69
    $region68: #{simulation_net_forward.1} parent=1 // pred_region
      _
    $region69: #{simulation_net_forward.1} parent=1 // pred_fallthru
      _
    // Predicated region
    $region70: #{simulation_net_forward.1} parent=1 // pred_check
      _
    $region71: #{simulation_net_forward.1} parent=1 // pred_check_branch
      %66 = sbr.rel (0) target = $region73
    $region72: #{simulation_net_forward.1} parent=1 // pred_region
      _
    $region73: #{simulation_net_forward.1} parent=1 // pred_fallthru
      _
    // Predicated region
    $region74: #{simulation_net_forward.1} parent=1 // pred_check
      _
    $region75: #{simulation_net_forward.1} parent=1 // pred_check_branch
      %68 = sbr.rel (0) target = $region77
    $region76: #{simulation_net_forward.1} parent=1 // pred_region
      _
    $region77: #{simulation_net_forward.1} parent=1 // pred_fallthru
      _
    // Predicated region
    $region78: #{simulation_net_forward.1} parent=1 // pred_check
      _
    $region79: #{simulation_net_forward.1} parent=1 // pred_check_branch
      %70 = sbr.rel (0) target = $region81
    $region80: #{simulation_net_forward.1} parent=1 // pred_region
      _
    $region81: #{simulation_net_forward.1} parent=1 // pred_fallthru
      _
    // Predicated region
    $region82: #{simulation_net_forward.1} parent=1 // pred_check
      _
    $region83: #{simulation_net_forward.1} parent=1 // pred_check_branch
      %72 = sbr.rel (0) target = $region85
    $region84: #{simulation_net_forward.1} parent=1 // pred_region
      _
    $region85: #{simulation_net_forward.1} parent=1 // pred_fallthru
      _
    // Predicated region
    $region86: #{simulation_net_forward.1} parent=1 // pred_check
      _
    $region87: #{simulation_net_forward.1} parent=1 // pred_check_branch
      %74 = sbr.rel (0) target = $region89
    $region88: #{simulation_net_forward.1} parent=1 // pred_region
      _
    $region89: #{simulation_net_forward.1} parent=1 // pred_fallthru
      _
    // Predicated region
    $region90: #{simulation_net_forward.1} parent=1 // pred_check
      _
    $region91: #{simulation_net_forward.1} parent=1 // pred_check_branch
      %76 = sbr.rel (0) target = $region93
    $region92: #{simulation_net_forward.1} parent=1 // pred_region
      _
    $region93: #{simulation_net_forward.1} parent=1 // pred_fallthru
      _
    %v78 = vld [vmem:[%s0] sm:$0xff]
    %v79 = vld [vmem:[%s0 + $0x8] sm:$0xff]
    %v80 = vpack.c.bf16 %v79, %v78
    %v81 = vld [vmem:[%s1] sm:$0xf]
    %v82 = vld [vmem:[%s1 + $0x4] sm:$0xf]
    %v83 = vld [vmem:[%s1 + $0x8] sm:$0xf]
    %v84 = vld [vmem:[%s11] sm:$0x1]
    %v86 = vlaneseq
    %v87 = vshrl.u32 %v86, 7
    %v88 = vsub.s32 0, %v87
    %v89 = vrot.slane %v84, %v88
    %v94 = vunpack.c.l.b16 %v81
    %v95 = vunpack.c.l.b16 %v82
    %v96 = vunpack.c.l.b16 %v83
    %v97 = vpack.c.b16 %v95, %v94
    %v98 = vpack.c.b16 %v96, %v96
    %vm100 = vcmask 195584
    %v102 = vsel %vm100, %v80, 0
    %vm104 = vcmask 1043456
    %v106 = vsel %vm104, %v98, 0
    %108 = vmatprep.subr.bf16.mxu0 0
    %109 = vmatpush1.bf16.msra.mxu0 %v97
    %110 = vmatprep.subr.bf16.mxu0 0
    %111 = vmatpush1.bf16.msra.mxu0 %v106
    %112 = vmatprep.subr.bf16.mxu0 0
    %113 = vmatpush1.bf16.msra.mxu0 0
    %114 = vmatprep.subr.bf16.mxu0 0
    %115 = vmatpush1.bf16.msra.mxu0 0
    %116 = vmatprep.subr.bf16.mxu0 0
    %117 = vmatpush1.bf16.msra.mxu0 0
    %118 = vmatprep.subr.bf16.mxu0 0
    %119 = vmatpush1.bf16.msra.mxu0 0
    %120 = vmatprep.subr.bf16.mxu0 0
    %121 = vmatpush1.bf16.msra.mxu0 0
    %122 = vmatprep.subr.bf16.mxu0 0
    %123 = vmatpush1.bf16.msra.mxu0 0
    %124 = vmatprep.subr.bf16.mxu0 0
    %125 = vmatpush1.bf16.msra.mxu0 0
    %126 = vmatprep.subr.bf16.mxu0 0
    %127 = vmatpush1.bf16.msra.mxu0 0
    %128 = vmatprep.subr.bf16.mxu0 0
    %129 = vmatpush1.bf16.msra.mxu0 0
    %130 = vmatprep.subr.bf16.mxu0 0
    %131 = vmatpush1.bf16.msra.mxu0 0
    %132 = vmatprep.subr.bf16.mxu0 0
    %133 = vmatpush1.bf16.msra.mxu0 0
    %134 = vmatprep.subr.bf16.mxu0 0
    %135 = vmatpush1.bf16.msra.mxu0 0
    %136 = vmatprep.subr.bf16.mxu0 0
    %137 = vmatpush1.bf16.msra.mxu0 0
    %138 = vmatprep.subr.bf16.mxu0 0
    %139 = vmatpush1.bf16.msra.mxu0 0
    %140 = vmatprep.mubr.bf16.mxu0 0
    %141 = vmatmul.mubr.bf16.gmra.mrb[0].mxu0 %v102
    %v142 = vpop.f32.mrb[0].mxu0
    %v143 = vadd.f32 %v89, %v142
    %v144 = vpop.f32.mrb[0].mxu0
    %v145 = vpop.f32.mrb[0].mxu0
    %v146 = vadd.f32 %v89, %v145
    %v147 = vpop.f32.mrb[0].mxu0
    %148 = vdwg.mxu0
    %vm149 = vcmp.gt.f32.partialorder %v143, 0.0
    %vm150 = vcmp.gt.f32.partialorder %v146, 0.0
    %v151 = vmin.f32 %v143, 0.0
    %v152 = vmin.f32 %v146, 0.0
    %v153 = vmul.f32 %v151, 1.442695
    %v154 = vpow.pop %v153
    %v155 = vmul.f32 %v152, 1.442695
    %v156 = vpow.pop %v155
    %v157 = vsub.f32 %v154, 1.0
    %v158 = vsub.f32 %v156, 1.0
    %v159 = vsel %vm149, %v143, %v157
    %v160 = vsel %vm150, %v146, %v158
    %v161 = vpack.c.bf16 %v160, %v159
    %v162 = vld [vmem:[%s2] sm:$0xf]
    %v163 = vld [vmem:[%s2 + $0x4] sm:$0xf]
    %v164 = vld [vmem:[%s2 + $0x8] sm:$0xf]
    %v165 = vld [vmem:[%s2 + $0xc] sm:$0xf]
    %v166 = vld [vmem:[%s2 + $0x10] sm:$0xf]
    %v167 = vld [vmem:[%s2 + $0x14] sm:$0xf]
    %v168 = vld [vmem:[%s2 + $0x18] sm:$0xf]
    %v169 = vld [vmem:[%s2 + $0x1c] sm:$0xf]
    %v170 = vld [vmem:[%s2 + $0x20] sm:$0xf]
    %v171 = vld [vmem:[%s2 + $0x24] sm:$0xf]
    %v172 = vld [vmem:[%s2 + $0x28] sm:$0xf]
    %v173 = vld [vmem:[%s2 + $0x2c] sm:$0xf]
    %v174 = vld [vmem:[%s2 + $0x30] sm:$0xf]
    %v175 = vld [vmem:[%s2 + $0x34] sm:$0xf]
    %v176 = vld [vmem:[%s2 + $0x38] sm:$0xf]
    %v177 = vld [vmem:[%s2 + $0x3c] sm:$0xf]
    %v178 = vld [vmem:[%s12] sm:$0x1]
    %v180 = vlaneseq
    %v181 = vshrl.u32 %v180, 7
    %v182 = vsub.s32 0, %v181
    %v183 = vrot.slane %v178, %v182
    %v201 = vunpack.c.l.b16 %v162
    %v202 = vunpack.c.l.b16 %v163
    %v203 = vunpack.c.l.b16 %v164
    %v204 = vunpack.c.l.b16 %v165
    %v205 = vunpack.c.l.b16 %v166
    %v206 = vunpack.c.l.b16 %v167
    %v207 = vunpack.c.l.b16 %v168
    %v208 = vunpack.c.l.b16 %v169
    %v209 = vunpack.c.l.b16 %v170
    %v210 = vunpack.c.l.b16 %v171
    %v211 = vunpack.c.l.b16 %v172
    %v212 = vunpack.c.l.b16 %v173
    %v213 = vunpack.c.l.b16 %v174
    %v214 = vunpack.c.l.b16 %v175
    %v215 = vunpack.c.l.b16 %v176
    %v216 = vunpack.c.l.b16 %v177
    %v217 = vpack.c.b16 %v202, %v201
    %v218 = vpack.c.b16 %v204, %v203
    %v219 = vpack.c.b16 %v206, %v205
    %v220 = vpack.c.b16 %v208, %v207
    %v221 = vpack.c.b16 %v210, %v209
    %v222 = vpack.c.b16 %v212, %v211
    %v223 = vpack.c.b16 %v214, %v213
    %v224 = vpack.c.b16 %v216, %v215
    %233 = vmatprep.subr.bf16.mxu0 0
    %234 = vmatpush1.bf16.msra.mxu0 %v217
    %235 = vmatprep.subr.bf16.mxu0 0
    %236 = vmatpush1.bf16.msra.mxu0 %v218
    %237 = vmatprep.subr.bf16.mxu0 0
    %238 = vmatpush1.bf16.msra.mxu0 %v219
    %239 = vmatprep.subr.bf16.mxu0 0
    %240 = vmatpush1.bf16.msra.mxu0 %v220
    %241 = vmatprep.subr.bf16.mxu0 0
    %242 = vmatpush1.bf16.msra.mxu0 %v221
    %243 = vmatprep.subr.bf16.mxu0 0
    %244 = vmatpush1.bf16.msra.mxu0 %v222
    %245 = vmatprep.subr.bf16.mxu0 0
    %246 = vmatpush1.bf16.msra.mxu0 %v223
    %247 = vmatprep.subr.bf16.mxu0 0
    %248 = vmatpush1.bf16.msra.mxu0 %v224
    %249 = vmatprep.subr.bf16.mxu0 0
    %250 = vmatpush1.bf16.msra.mxu0 0
    %251 = vmatprep.subr.bf16.mxu0 0
    %252 = vmatpush1.bf16.msra.mxu0 0
    %253 = vmatprep.subr.bf16.mxu0 0
    %254 = vmatpush1.bf16.msra.mxu0 0
    %255 = vmatprep.subr.bf16.mxu0 0
    %256 = vmatpush1.bf16.msra.mxu0 0
    %257 = vmatprep.subr.bf16.mxu0 0
    %258 = vmatpush1.bf16.msra.mxu0 0
    %259 = vmatprep.subr.bf16.mxu0 0
    %260 = vmatpush1.bf16.msra.mxu0 0
    %261 = vmatprep.subr.bf16.mxu0 0
    %262 = vmatpush1.bf16.msra.mxu0 0
    %263 = vmatprep.subr.bf16.mxu0 0
    %264 = vmatpush1.bf16.msra.mxu0 0
    %265 = vmatprep.mubr.bf16.mxu0 0
    %266 = vmatmul.mubr.bf16.gmra.mrb[0].mxu0 %v161
    %v267 = vpop.f32.mrb[0].mxu0
    %v268 = vadd.f32 %v183, %v267
    %v269 = vpop.f32.mrb[0].mxu0
    %v270 = vpop.f32.mrb[0].mxu0
    %v271 = vadd.f32 %v183, %v270
    %v272 = vpop.f32.mrb[0].mxu0
    %273 = vdwg.mxu0
    %vm274 = vcmp.gt.f32.partialorder %v268, 0.0
    %vm275 = vcmp.gt.f32.partialorder %v271, 0.0
    %v276 = vmin.f32 %v268, 0.0
    %v277 = vmin.f32 %v271, 0.0
    %v278 = vmul.f32 %v276, 1.442695
    %v279 = vpow.pop %v278
    %v280 = vmul.f32 %v277, 1.442695
    %v281 = vpow.pop %v280
    %v282 = vsub.f32 %v279, 1.0
    %v283 = vsub.f32 %v281, 1.0
    %v284 = vsel %vm274, %v268, %v282
    %v285 = vsel %vm275, %v271, %v283
    %v286 = vpack.c.bf16 %v285, %v284
    %v287 = vld [vmem:[%s3] sm:$0xf]
    %v288 = vld [vmem:[%s3 + $0x4] sm:$0xf]
    %v289 = vld [vmem:[%s3 + $0x8] sm:$0xf]
    %v290 = vld [vmem:[%s3 + $0xc] sm:$0xf]
    %v291 = vld [vmem:[%s3 + $0x10] sm:$0xf]
    %v292 = vld [vmem:[%s3 + $0x14] sm:$0xf]
    %v293 = vld [vmem:[%s3 + $0x18] sm:$0xf]
    %v294 = vld [vmem:[%s3 + $0x1c] sm:$0xf]
    %v295 = vld [vmem:[%s3 + $0x20] sm:$0xf]
    %v296 = vld [vmem:[%s3 + $0x24] sm:$0xf]
    %v297 = vld [vmem:[%s3 + $0x28] sm:$0xf]
    %v298 = vld [vmem:[%s3 + $0x2c] sm:$0xf]
    %v299 = vld [vmem:[%s3 + $0x30] sm:$0xf]
    %v300 = vld [vmem:[%s3 + $0x34] sm:$0xf]
    %v301 = vld [vmem:[%s3 + $0x38] sm:$0xf]
    %v302 = vld [vmem:[%s3 + $0x3c] sm:$0xf]
    %v303 = vld [vmem:[%s13] sm:$0x1]
    %v305 = vlaneseq
    %v306 = vshrl.u32 %v305, 7
    %v307 = vsub.s32 0, %v306
    %v308 = vrot.slane %v303, %v307
    %v326 = vunpack.c.l.b16 %v287
    %v327 = vunpack.c.l.b16 %v288
    %v328 = vunpack.c.l.b16 %v289
    %v329 = vunpack.c.l.b16 %v290
    %v330 = vunpack.c.l.b16 %v291
    %v331 = vunpack.c.l.b16 %v292
    %v332 = vunpack.c.l.b16 %v293
    %v333 = vunpack.c.l.b16 %v294
    %v334 = vunpack.c.l.b16 %v295
    %v335 = vunpack.c.l.b16 %v296
    %v336 = vunpack.c.l.b16 %v297
    %v337 = vunpack.c.l.b16 %v298
    %v338 = vunpack.c.l.b16 %v299
    %v339 = vunpack.c.l.b16 %v300
    %v340 = vunpack.c.l.b16 %v301
    %v341 = vunpack.c.l.b16 %v302
    %v342 = vpack.c.b16 %v327, %v326
    %v343 = vpack.c.b16 %v329, %v328
    %v344 = vpack.c.b16 %v331, %v330
    %v345 = vpack.c.b16 %v333, %v332
    %v346 = vpack.c.b16 %v335, %v334
    %v347 = vpack.c.b16 %v337, %v336
    %v348 = vpack.c.b16 %v339, %v338
    %v349 = vpack.c.b16 %v341, %v340
    %358 = vmatprep.subr.bf16.mxu0 0
    %359 = vmatpush1.bf16.msra.mxu0 %v342
    %360 = vmatprep.subr.bf16.mxu0 0
    %361 = vmatpush1.bf16.msra.mxu0 %v343
    %362 = vmatprep.subr.bf16.mxu0 0
    %363 = vmatpush1.bf16.msra.mxu0 %v344
    %364 = vmatprep.subr.bf16.mxu0 0
    %365 = vmatpush1.bf16.msra.mxu0 %v345
    %366 = vmatprep.subr.bf16.mxu0 0
    %367 = vmatpush1.bf16.msra.mxu0 %v346
    %368 = vmatprep.subr.bf16.mxu0 0
    %369 = vmatpush1.bf16.msra.mxu0 %v347
    %370 = vmatprep.subr.bf16.mxu0 0
    %371 = vmatpush1.bf16.msra.mxu0 %v348
    %372 = vmatprep.subr.bf16.mxu0 0
    %373 = vmatpush1.bf16.msra.mxu0 %v349
    %374 = vmatprep.subr.bf16.mxu0 0
    %375 = vmatpush1.bf16.msra.mxu0 0
    %376 = vmatprep.subr.bf16.mxu0 0
    %377 = vmatpush1.bf16.msra.mxu0 0
    %378 = vmatprep.subr.bf16.mxu0 0
    %379 = vmatpush1.bf16.msra.mxu0 0
    %380 = vmatprep.subr.bf16.mxu0 0
    %381 = vmatpush1.bf16.msra.mxu0 0
    %382 = vmatprep.subr.bf16.mxu0 0
    %383 = vmatpush1.bf16.msra.mxu0 0
    %384 = vmatprep.subr.bf16.mxu0 0
    %385 = vmatpush1.bf16.msra.mxu0 0
    %386 = vmatprep.subr.bf16.mxu0 0
    %387 = vmatpush1.bf16.msra.mxu0 0
    %388 = vmatprep.subr.bf16.mxu0 0
    %389 = vmatpush1.bf16.msra.mxu0 0
    %390 = vmatprep.mubr.bf16.mxu0 0
    %391 = vmatmul.mubr.bf16.gmra.mrb[0].mxu0 %v286
    %v392 = vpop.f32.mrb[0].mxu0
    %v393 = vadd.f32 %v308, %v392
    %v394 = vpop.f32.mrb[0].mxu0
    %v395 = vpop.f32.mrb[0].mxu0
    %v396 = vadd.f32 %v308, %v395
    %v397 = vpop.f32.mrb[0].mxu0
    %398 = vdwg.mxu0
    %vm399 = vcmp.gt.f32.partialorder %v393, 0.0
    %vm400 = vcmp.gt.f32.partialorder %v396, 0.0
    %v401 = vmin.f32 %v393, 0.0
    %v402 = vmin.f32 %v396, 0.0
    %v403 = vmul.f32 %v401, 1.442695
    %v404 = vpow.pop %v403
    %v405 = vmul.f32 %v402, 1.442695
    %v406 = vpow.pop %v405
    %v407 = vsub.f32 %v404, 1.0
    %v408 = vsub.f32 %v406, 1.0
    %v409 = vsel %vm399, %v393, %v407
    %v410 = vsel %vm400, %v396, %v408
    %v411 = vpack.c.bf16 %v410, %v409
    %v412 = vld [vmem:[%s4] sm:$0xf]
    %v413 = vld [vmem:[%s4 + $0x4] sm:$0xf]
    %v414 = vld [vmem:[%s4 + $0x8] sm:$0xf]
    %v415 = vld [vmem:[%s4 + $0xc] sm:$0xf]
    %v416 = vld [vmem:[%s4 + $0x10] sm:$0xf]
    %v417 = vld [vmem:[%s4 + $0x14] sm:$0xf]
    %v418 = vld [vmem:[%s4 + $0x18] sm:$0xf]
    %v419 = vld [vmem:[%s4 + $0x1c] sm:$0xf]
    %v420 = vld [vmem:[%s4 + $0x20] sm:$0xf]
    %v421 = vld [vmem:[%s4 + $0x24] sm:$0xf]
    %v422 = vld [vmem:[%s4 + $0x28] sm:$0xf]
    %v423 = vld [vmem:[%s4 + $0x2c] sm:$0xf]
    %v424 = vld [vmem:[%s4 + $0x30] sm:$0xf]
    %v425 = vld [vmem:[%s4 + $0x34] sm:$0xf]
    %v426 = vld [vmem:[%s4 + $0x38] sm:$0xf]
    %v427 = vld [vmem:[%s4 + $0x3c] sm:$0xf]
    %v428 = vld [vmem:[%s14] sm:$0x1]
    %v430 = vlaneseq
    %v431 = vshrl.u32 %v430, 7
    %v432 = vsub.s32 0, %v431
    %v433 = vrot.slane %v428, %v432
    %v451 = vunpack.c.l.b16 %v412
    %v452 = vunpack.c.l.b16 %v413
    %v453 = vunpack.c.l.b16 %v414
    %v454 = vunpack.c.l.b16 %v415
    %v455 = vunpack.c.l.b16 %v416
    %v456 = vunpack.c.l.b16 %v417
    %v457 = vunpack.c.l.b16 %v418
    %v458 = vunpack.c.l.b16 %v419
    %v459 = vunpack.c.l.b16 %v420
    %v460 = vunpack.c.l.b16 %v421
    %v461 = vunpack.c.l.b16 %v422
    %v462 = vunpack.c.l.b16 %v423
    %v463 = vunpack.c.l.b16 %v424
    %v464 = vunpack.c.l.b16 %v425
    %v465 = vunpack.c.l.b16 %v426
    %v466 = vunpack.c.l.b16 %v427
    %v467 = vpack.c.b16 %v452, %v451
    %v468 = vpack.c.b16 %v454, %v453
    %v469 = vpack.c.b16 %v456, %v455
    %v470 = vpack.c.b16 %v458, %v457
    %v471 = vpack.c.b16 %v460, %v459
    %v472 = vpack.c.b16 %v462, %v461
    %v473 = vpack.c.b16 %v464, %v463
    %v474 = vpack.c.b16 %v466, %v465
    %483 = vmatprep.subr.bf16.mxu0 0
    %484 = vmatpush1.bf16.msra.mxu0 %v467
    %485 = vmatprep.subr.bf16.mxu0 0
    %486 = vmatpush1.bf16.msra.mxu0 %v468
    %487 = vmatprep.subr.bf16.mxu0 0
    %488 = vmatpush1.bf16.msra.mxu0 %v469
    %489 = vmatprep.subr.bf16.mxu0 0
    %490 = vmatpush1.bf16.msra.mxu0 %v470
    %491 = vmatprep.subr.bf16.mxu0 0
    %492 = vmatpush1.bf16.msra.mxu0 %v471
    %493 = vmatprep.subr.bf16.mxu0 0
    %494 = vmatpush1.bf16.msra.mxu0 %v472
    %495 = vmatprep.subr.bf16.mxu0 0
    %496 = vmatpush1.bf16.msra.mxu0 %v473
    %497 = vmatprep.subr.bf16.mxu0 0
    %498 = vmatpush1.bf16.msra.mxu0 %v474
    %499 = vmatprep.subr.bf16.mxu0 0
    %500 = vmatpush1.bf16.msra.mxu0 0
    %501 = vmatprep.subr.bf16.mxu0 0
    %502 = vmatpush1.bf16.msra.mxu0 0
    %503 = vmatprep.subr.bf16.mxu0 0
    %504 = vmatpush1.bf16.msra.mxu0 0
    %505 = vmatprep.subr.bf16.mxu0 0
    %506 = vmatpush1.bf16.msra.mxu0 0
    %507 = vmatprep.subr.bf16.mxu0 0
    %508 = vmatpush1.bf16.msra.mxu0 0
    %509 = vmatprep.subr.bf16.mxu0 0
    %510 = vmatpush1.bf16.msra.mxu0 0
    %511 = vmatprep.subr.bf16.mxu0 0
    %512 = vmatpush1.bf16.msra.mxu0 0
    %513 = vmatprep.subr.bf16.mxu0 0
    %514 = vmatpush1.bf16.msra.mxu0 0
    %515 = vmatprep.mubr.bf16.mxu0 0
    %516 = vmatmul.mubr.bf16.gmra.mrb[0].mxu0 %v411
    %v517 = vpop.f32.mrb[0].mxu0
    %v518 = vadd.f32 %v433, %v517
    %v519 = vpop.f32.mrb[0].mxu0
    %v520 = vpop.f32.mrb[0].mxu0
    %v521 = vadd.f32 %v433, %v520
    %v522 = vpop.f32.mrb[0].mxu0
    %523 = vdwg.mxu0
    %vm524 = vcmp.gt.f32.partialorder %v518, 0.0
    %vm525 = vcmp.gt.f32.partialorder %v521, 0.0
    %v526 = vmin.f32 %v518, 0.0
    %v527 = vmin.f32 %v521, 0.0
    %v528 = vmul.f32 %v526, 1.442695
    %v529 = vpow.pop %v528
    %v530 = vmul.f32 %v527, 1.442695
    %v531 = vpow.pop %v530
    %v532 = vsub.f32 %v529, 1.0
    %v533 = vsub.f32 %v531, 1.0
    %v534 = vsel %vm524, %v518, %v532
    %v535 = vsel %vm525, %v521, %v533
    %v536 = vpack.c.bf16 %v535, %v534
    %v537 = vld [vmem:[%s5] sm:$0xf]
    %v538 = vld [vmem:[%s5 + $0x4] sm:$0xf]
    %v539 = vld [vmem:[%s5 + $0x8] sm:$0xf]
    %v540 = vld [vmem:[%s5 + $0xc] sm:$0xf]
    %v541 = vld [vmem:[%s5 + $0x10] sm:$0xf]
    %v542 = vld [vmem:[%s5 + $0x14] sm:$0xf]
    %v543 = vld [vmem:[%s5 + $0x18] sm:$0xf]
    %v544 = vld [vmem:[%s5 + $0x1c] sm:$0xf]
    %v545 = vld [vmem:[%s5 + $0x20] sm:$0xf]
    %v546 = vld [vmem:[%s5 + $0x24] sm:$0xf]
    %v547 = vld [vmem:[%s5 + $0x28] sm:$0xf]
    %v548 = vld [vmem:[%s5 + $0x2c] sm:$0xf]
    %v549 = vld [vmem:[%s5 + $0x30] sm:$0xf]
    %v550 = vld [vmem:[%s5 + $0x34] sm:$0xf]
    %v551 = vld [vmem:[%s5 + $0x38] sm:$0xf]
    %v552 = vld [vmem:[%s5 + $0x3c] sm:$0xf]
    %v553 = vld [vmem:[%s15] sm:$0x1]
    %v555 = vlaneseq
    %v556 = vshrl.u32 %v555, 7
    %v557 = vsub.s32 0, %v556
    %v558 = vrot.slane %v553, %v557
    %v576 = vunpack.c.l.b16 %v537
    %v577 = vunpack.c.l.b16 %v538
    %v578 = vunpack.c.l.b16 %v539
    %v579 = vunpack.c.l.b16 %v540
    %v580 = vunpack.c.l.b16 %v541
    %v581 = vunpack.c.l.b16 %v542
    %v582 = vunpack.c.l.b16 %v543
    %v583 = vunpack.c.l.b16 %v544
    %v584 = vunpack.c.l.b16 %v545
    %v585 = vunpack.c.l.b16 %v546
    %v586 = vunpack.c.l.b16 %v547
    %v587 = vunpack.c.l.b16 %v548
    %v588 = vunpack.c.l.b16 %v549
    %v589 = vunpack.c.l.b16 %v550
    %v590 = vunpack.c.l.b16 %v551
    %v591 = vunpack.c.l.b16 %v552
    %v592 = vpack.c.b16 %v577, %v576
    %v593 = vpack.c.b16 %v579, %v578
    %v594 = vpack.c.b16 %v581, %v580
    %v595 = vpack.c.b16 %v583, %v582
    %v596 = vpack.c.b16 %v585, %v584
    %v597 = vpack.c.b16 %v587, %v586
    %v598 = vpack.c.b16 %v589, %v588
    %v599 = vpack.c.b16 %v591, %v590
    %608 = vmatprep.subr.bf16.mxu0 0
    %609 = vmatpush1.bf16.msra.mxu0 %v592
    %610 = vmatprep.subr.bf16.mxu0 0
    %611 = vmatpush1.bf16.msra.mxu0 %v593
    %612 = vmatprep.subr.bf16.mxu0 0
    %613 = vmatpush1.bf16.msra.mxu0 %v594
    %614 = vmatprep.subr.bf16.mxu0 0
    %615 = vmatpush1.bf16.msra.mxu0 %v595
    %616 = vmatprep.subr.bf16.mxu0 0
    %617 = vmatpush1.bf16.msra.mxu0 %v596
    %618 = vmatprep.subr.bf16.mxu0 0
    %619 = vmatpush1.bf16.msra.mxu0 %v597
    %620 = vmatprep.subr.bf16.mxu0 0
    %621 = vmatpush1.bf16.msra.mxu0 %v598
    %622 = vmatprep.subr.bf16.mxu0 0
    %623 = vmatpush1.bf16.msra.mxu0 %v599
    %624 = vmatprep.subr.bf16.mxu0 0
    %625 = vmatpush1.bf16.msra.mxu0 0
    %626 = vmatprep.subr.bf16.mxu0 0
    %627 = vmatpush1.bf16.msra.mxu0 0
    %628 = vmatprep.subr.bf16.mxu0 0
    %629 = vmatpush1.bf16.msra.mxu0 0
    %630 = vmatprep.subr.bf16.mxu0 0
    %631 = vmatpush1.bf16.msra.mxu0 0
    %632 = vmatprep.subr.bf16.mxu0 0
    %633 = vmatpush1.bf16.msra.mxu0 0
    %634 = vmatprep.subr.bf16.mxu0 0
    %635 = vmatpush1.bf16.msra.mxu0 0
    %636 = vmatprep.subr.bf16.mxu0 0
    %637 = vmatpush1.bf16.msra.mxu0 0
    %638 = vmatprep.subr.bf16.mxu0 0
    %639 = vmatpush1.bf16.msra.mxu0 0
    %640 = vmatprep.mubr.bf16.mxu0 0
    %641 = vmatmul.mubr.bf16.gmra.mrb[0].mxu0 %v536
    %v642 = vpop.f32.mrb[0].mxu0
    %v643 = vadd.f32 %v558, %v642
    %v644 = vpop.f32.mrb[0].mxu0
    %v645 = vpop.f32.mrb[0].mxu0
    %v646 = vadd.f32 %v558, %v645
    %v647 = vpop.f32.mrb[0].mxu0
    %648 = vdwg.mxu0
    %vm649 = vcmp.gt.f32.partialorder %v643, 0.0
    %vm650 = vcmp.gt.f32.partialorder %v646, 0.0
    %v651 = vmin.f32 %v643, 0.0
    %v652 = vmin.f32 %v646, 0.0
    %v653 = vmul.f32 %v651, 1.442695
    %v654 = vpow.pop %v653
    %v655 = vmul.f32 %v652, 1.442695
    %v656 = vpow.pop %v655
    %v657 = vsub.f32 %v654, 1.0
    %v658 = vsub.f32 %v656, 1.0
    %v659 = vsel %vm649, %v643, %v657
    %v660 = vsel %vm650, %v646, %v658
    %v661 = vpack.c.bf16 %v660, %v659
    %v662 = vld [vmem:[%s6] sm:$0xf]
    %v663 = vld [vmem:[%s6 + $0x4] sm:$0xf]
    %v664 = vld [vmem:[%s6 + $0x8] sm:$0xf]
    %v665 = vld [vmem:[%s6 + $0xc] sm:$0xf]
    %v666 = vld [vmem:[%s6 + $0x10] sm:$0xf]
    %v667 = vld [vmem:[%s6 + $0x14] sm:$0xf]
    %v668 = vld [vmem:[%s6 + $0x18] sm:$0xf]
    %v669 = vld [vmem:[%s6 + $0x1c] sm:$0xf]
    %v670 = vld [vmem:[%s6 + $0x20] sm:$0xf]
    %v671 = vld [vmem:[%s6 + $0x24] sm:$0xf]
    %v672 = vld [vmem:[%s6 + $0x28] sm:$0xf]
    %v673 = vld [vmem:[%s6 + $0x2c] sm:$0xf]
    %v674 = vld [vmem:[%s6 + $0x30] sm:$0xf]
    %v675 = vld [vmem:[%s6 + $0x34] sm:$0xf]
    %v676 = vld [vmem:[%s6 + $0x38] sm:$0xf]
    %v677 = vld [vmem:[%s6 + $0x3c] sm:$0xf]
    %v678 = vld [vmem:[%s16] sm:$0x1]
    %v680 = vlaneseq
    %v681 = vshrl.u32 %v680, 7
    %v682 = vsub.s32 0, %v681
    %v683 = vrot.slane %v678, %v682
    %v701 = vunpack.c.l.b16 %v662
    %v702 = vunpack.c.l.b16 %v663
    %v703 = vunpack.c.l.b16 %v664
    %v704 = vunpack.c.l.b16 %v665
    %v705 = vunpack.c.l.b16 %v666
    %v706 = vunpack.c.l.b16 %v667
    %v707 = vunpack.c.l.b16 %v668
    %v708 = vunpack.c.l.b16 %v669
    %v709 = vunpack.c.l.b16 %v670
    %v710 = vunpack.c.l.b16 %v671
    %v711 = vunpack.c.l.b16 %v672
    %v712 = vunpack.c.l.b16 %v673
    %v713 = vunpack.c.l.b16 %v674
    %v714 = vunpack.c.l.b16 %v675
    %v715 = vunpack.c.l.b16 %v676
    %v716 = vunpack.c.l.b16 %v677
    %v717 = vpack.c.b16 %v702, %v701
    %v718 = vpack.c.b16 %v704, %v703
    %v719 = vpack.c.b16 %v706, %v705
    %v720 = vpack.c.b16 %v708, %v707
    %v721 = vpack.c.b16 %v710, %v709
    %v722 = vpack.c.b16 %v712, %v711
    %v723 = vpack.c.b16 %v714, %v713
    %v724 = vpack.c.b16 %v716, %v715
    %733 = vmatprep.subr.bf16.mxu0 0
    %734 = vmatpush1.bf16.msra.mxu0 %v717
    %735 = vmatprep.subr.bf16.mxu0 0
    %736 = vmatpush1.bf16.msra.mxu0 %v718
    %737 = vmatprep.subr.bf16.mxu0 0
    %738 = vmatpush1.bf16.msra.mxu0 %v719
    %739 = vmatprep.subr.bf16.mxu0 0
    %740 = vmatpush1.bf16.msra.mxu0 %v720
    %741 = vmatprep.subr.bf16.mxu0 0
    %742 = vmatpush1.bf16.msra.mxu0 %v721
    %743 = vmatprep.subr.bf16.mxu0 0
    %744 = vmatpush1.bf16.msra.mxu0 %v722
    %745 = vmatprep.subr.bf16.mxu0 0
    %746 = vmatpush1.bf16.msra.mxu0 %v723
    %747 = vmatprep.subr.bf16.mxu0 0
    %748 = vmatpush1.bf16.msra.mxu0 %v724
    %749 = vmatprep.subr.bf16.mxu0 0
    %750 = vmatpush1.bf16.msra.mxu0 0
    %751 = vmatprep.subr.bf16.mxu0 0
    %752 = vmatpush1.bf16.msra.mxu0 0
    %753 = vmatprep.subr.bf16.mxu0 0
    %754 = vmatpush1.bf16.msra.mxu0 0
    %755 = vmatprep.subr.bf16.mxu0 0
    %756 = vmatpush1.bf16.msra.mxu0 0
    %757 = vmatprep.subr.bf16.mxu0 0
    %758 = vmatpush1.bf16.msra.mxu0 0
    %759 = vmatprep.subr.bf16.mxu0 0
    %760 = vmatpush1.bf16.msra.mxu0 0
    %761 = vmatprep.subr.bf16.mxu0 0
    %762 = vmatpush1.bf16.msra.mxu0 0
    %763 = vmatprep.subr.bf16.mxu0 0
    %764 = vmatpush1.bf16.msra.mxu0 0
    %765 = vmatprep.mubr.bf16.mxu0 0
    %766 = vmatmul.mubr.bf16.gmra.mrb[0].mxu0 %v661
    %v767 = vpop.f32.mrb[0].mxu0
    %v768 = vadd.f32 %v683, %v767
    %v769 = vpop.f32.mrb[0].mxu0
    %v770 = vpop.f32.mrb[0].mxu0
    %v771 = vadd.f32 %v683, %v770
    %v772 = vpop.f32.mrb[0].mxu0
    %773 = vdwg.mxu0
    %vm774 = vcmp.gt.f32.partialorder %v768, 0.0
    %vm775 = vcmp.gt.f32.partialorder %v771, 0.0
    %v776 = vmin.f32 %v768, 0.0
    %v777 = vmin.f32 %v771, 0.0
    %v778 = vmul.f32 %v776, 1.442695
    %v779 = vpow.pop %v778
    %v780 = vmul.f32 %v777, 1.442695
    %v781 = vpow.pop %v780
    %v782 = vsub.f32 %v779, 1.0
    %v783 = vsub.f32 %v781, 1.0
    %v784 = vsel %vm774, %v768, %v782
    %v785 = vsel %vm775, %v771, %v783
    %v786 = vpack.c.bf16 %v785, %v784
    %v787 = vld [vmem:[%s7] sm:$0xf]
    %v788 = vld [vmem:[%s7 + $0x4] sm:$0xf]
    %v789 = vld [vmem:[%s7 + $0x8] sm:$0xf]
    %v790 = vld [vmem:[%s7 + $0xc] sm:$0xf]
    %v791 = vld [vmem:[%s7 + $0x10] sm:$0xf]
    %v792 = vld [vmem:[%s7 + $0x14] sm:$0xf]
    %v793 = vld [vmem:[%s7 + $0x18] sm:$0xf]
    %v794 = vld [vmem:[%s7 + $0x1c] sm:$0xf]
    %v795 = vld [vmem:[%s7 + $0x20] sm:$0xf]
    %v796 = vld [vmem:[%s7 + $0x24] sm:$0xf]
    %v797 = vld [vmem:[%s7 + $0x28] sm:$0xf]
    %v798 = vld [vmem:[%s7 + $0x2c] sm:$0xf]
    %v799 = vld [vmem:[%s7 + $0x30] sm:$0xf]
    %v800 = vld [vmem:[%s7 + $0x34] sm:$0xf]
    %v801 = vld [vmem:[%s7 + $0x38] sm:$0xf]
    %v802 = vld [vmem:[%s7 + $0x3c] sm:$0xf]
    %v803 = vld [vmem:[%s17] sm:$0x1]
    %v805 = vlaneseq
    %v806 = vshrl.u32 %v805, 7
    %v807 = vsub.s32 0, %v806
    %v808 = vrot.slane %v803, %v807
    %v826 = vunpack.c.l.b16 %v787
    %v827 = vunpack.c.l.b16 %v788
    %v828 = vunpack.c.l.b16 %v789
    %v829 = vunpack.c.l.b16 %v790
    %v830 = vunpack.c.l.b16 %v791
    %v831 = vunpack.c.l.b16 %v792
    %v832 = vunpack.c.l.b16 %v793
    %v833 = vunpack.c.l.b16 %v794
    %v834 = vunpack.c.l.b16 %v795
    %v835 = vunpack.c.l.b16 %v796
    %v836 = vunpack.c.l.b16 %v797
    %v837 = vunpack.c.l.b16 %v798
    %v838 = vunpack.c.l.b16 %v799
    %v839 = vunpack.c.l.b16 %v800
    %v840 = vunpack.c.l.b16 %v801
    %v841 = vunpack.c.l.b16 %v802
    %v842 = vpack.c.b16 %v827, %v826
    %v843 = vpack.c.b16 %v829, %v828
    %v844 = vpack.c.b16 %v831, %v830
    %v845 = vpack.c.b16 %v833, %v832
    %v846 = vpack.c.b16 %v835, %v834
    %v847 = vpack.c.b16 %v837, %v836
    %v848 = vpack.c.b16 %v839, %v838
    %v849 = vpack.c.b16 %v841, %v840
    %858 = vmatprep.subr.bf16.mxu0 0
    %859 = vmatpush1.bf16.msra.mxu0 %v842
    %860 = vmatprep.subr.bf16.mxu0 0
    %861 = vmatpush1.bf16.msra.mxu0 %v843
    %862 = vmatprep.subr.bf16.mxu0 0
    %863 = vmatpush1.bf16.msra.mxu0 %v844
    %864 = vmatprep.subr.bf16.mxu0 0
    %865 = vmatpush1.bf16.msra.mxu0 %v845
    %866 = vmatprep.subr.bf16.mxu0 0
    %867 = vmatpush1.bf16.msra.mxu0 %v846
    %868 = vmatprep.subr.bf16.mxu0 0
    %869 = vmatpush1.bf16.msra.mxu0 %v847
    %870 = vmatprep.subr.bf16.mxu0 0
    %871 = vmatpush1.bf16.msra.mxu0 %v848
    %872 = vmatprep.subr.bf16.mxu0 0
    %873 = vmatpush1.bf16.msra.mxu0 %v849
    %874 = vmatprep.subr.bf16.mxu0 0
    %875 = vmatpush1.bf16.msra.mxu0 0
    %876 = vmatprep.subr.bf16.mxu0 0
    %877 = vmatpush1.bf16.msra.mxu0 0
    %878 = vmatprep.subr.bf16.mxu0 0
    %879 = vmatpush1.bf16.msra.mxu0 0
    %880 = vmatprep.subr.bf16.mxu0 0
    %881 = vmatpush1.bf16.msra.mxu0 0
    %882 = vmatprep.subr.bf16.mxu0 0
    %883 = vmatpush1.bf16.msra.mxu0 0
    %884 = vmatprep.subr.bf16.mxu0 0
    %885 = vmatpush1.bf16.msra.mxu0 0
    %886 = vmatprep.subr.bf16.mxu0 0
    %887 = vmatpush1.bf16.msra.mxu0 0
    %888 = vmatprep.subr.bf16.mxu0 0
    %889 = vmatpush1.bf16.msra.mxu0 0
    %890 = vmatprep.mubr.bf16.mxu0 0
    %891 = vmatmul.mubr.bf16.gmra.mrb[0].mxu0 %v786
    %v892 = vpop.f32.mrb[0].mxu0
    %v893 = vadd.f32 %v808, %v892
    %v894 = vpop.f32.mrb[0].mxu0
    %v895 = vpop.f32.mrb[0].mxu0
    %v896 = vadd.f32 %v808, %v895
    %v897 = vpop.f32.mrb[0].mxu0
    %898 = vdwg.mxu0
    %vm899 = vcmp.gt.f32.partialorder %v893, 0.0
    %vm900 = vcmp.gt.f32.partialorder %v896, 0.0
    %v901 = vmin.f32 %v893, 0.0
    %v902 = vmin.f32 %v896, 0.0
    %v903 = vmul.f32 %v901, 1.442695
    %v904 = vpow.pop %v903
    %v905 = vmul.f32 %v902, 1.442695
    %v906 = vpow.pop %v905
    %v907 = vsub.f32 %v904, 1.0
    %v908 = vsub.f32 %v906, 1.0
    %v909 = vsel %vm899, %v893, %v907
    %v910 = vsel %vm900, %v896, %v908
    %v911 = vpack.c.bf16 %v910, %v909
    %v912 = vld [vmem:[%s8] sm:$0xf]
    %v913 = vld [vmem:[%s8 + $0x4] sm:$0xf]
    %v914 = vld [vmem:[%s8 + $0x8] sm:$0xf]
    %v915 = vld [vmem:[%s8 + $0xc] sm:$0xf]
    %v916 = vld [vmem:[%s8 + $0x10] sm:$0xf]
    %v917 = vld [vmem:[%s8 + $0x14] sm:$0xf]
    %v918 = vld [vmem:[%s8 + $0x18] sm:$0xf]
    %v919 = vld [vmem:[%s8 + $0x1c] sm:$0xf]
    %v920 = vld [vmem:[%s8 + $0x20] sm:$0xf]
    %v921 = vld [vmem:[%s8 + $0x24] sm:$0xf]
    %v922 = vld [vmem:[%s8 + $0x28] sm:$0xf]
    %v923 = vld [vmem:[%s8 + $0x2c] sm:$0xf]
    %v924 = vld [vmem:[%s8 + $0x30] sm:$0xf]
    %v925 = vld [vmem:[%s8 + $0x34] sm:$0xf]
    %v926 = vld [vmem:[%s8 + $0x38] sm:$0xf]
    %v927 = vld [vmem:[%s8 + $0x3c] sm:$0xf]
    %v928 = vld [vmem:[%s18] sm:$0x1]
    %v930 = vlaneseq
    %v931 = vshrl.u32 %v930, 7
    %v932 = vsub.s32 0, %v931
    %v933 = vrot.slane %v928, %v932
    %v951 = vunpack.c.l.b16 %v912
    %v952 = vunpack.c.l.b16 %v913
    %v953 = vunpack.c.l.b16 %v914
    %v954 = vunpack.c.l.b16 %v915
    %v955 = vunpack.c.l.b16 %v916
    %v956 = vunpack.c.l.b16 %v917
    %v957 = vunpack.c.l.b16 %v918
    %v958 = vunpack.c.l.b16 %v919
    %v959 = vunpack.c.l.b16 %v920
    %v960 = vunpack.c.l.b16 %v921
    %v961 = vunpack.c.l.b16 %v922
    %v962 = vunpack.c.l.b16 %v923
    %v963 = vunpack.c.l.b16 %v924
    %v964 = vunpack.c.l.b16 %v925
    %v965 = vunpack.c.l.b16 %v926
    %v966 = vunpack.c.l.b16 %v927
    %v967 = vpack.c.b16 %v952, %v951
    %v968 = vpack.c.b16 %v954, %v953
    %v969 = vpack.c.b16 %v956, %v955
    %v970 = vpack.c.b16 %v958, %v957
    %v971 = vpack.c.b16 %v960, %v959
    %v972 = vpack.c.b16 %v962, %v961
    %v973 = vpack.c.b16 %v964, %v963
    %v974 = vpack.c.b16 %v966, %v965
    %983 = vmatprep.subr.bf16.mxu0 0
    %984 = vmatpush1.bf16.msra.mxu0 %v967
    %985 = vmatprep.subr.bf16.mxu0 0
    %986 = vmatpush1.bf16.msra.mxu0 %v968
    %987 = vmatprep.subr.bf16.mxu0 0
    %988 = vmatpush1.bf16.msra.mxu0 %v969
    %989 = vmatprep.subr.bf16.mxu0 0
    %990 = vmatpush1.bf16.msra.mxu0 %v970
    %991 = vmatprep.subr.bf16.mxu0 0
    %992 = vmatpush1.bf16.msra.mxu0 %v971
    %993 = vmatprep.subr.bf16.mxu0 0
    %994 = vmatpush1.bf16.msra.mxu0 %v972
    %995 = vmatprep.subr.bf16.mxu0 0
    %996 = vmatpush1.bf16.msra.mxu0 %v973
    %997 = vmatprep.subr.bf16.mxu0 0
    %998 = vmatpush1.bf16.msra.mxu0 %v974
    %999 = vmatprep.subr.bf16.mxu0 0
    %1000 = vmatpush1.bf16.msra.mxu0 0
    %1001 = vmatprep.subr.bf16.mxu0 0
    %1002 = vmatpush1.bf16.msra.mxu0 0
    %1003 = vmatprep.subr.bf16.mxu0 0
    %1004 = vmatpush1.bf16.msra.mxu0 0
    %1005 = vmatprep.subr.bf16.mxu0 0
    %1006 = vmatpush1.bf16.msra.mxu0 0
    %1007 = vmatprep.subr.bf16.mxu0 0
    %1008 = vmatpush1.bf16.msra.mxu0 0
    %1009 = vmatprep.subr.bf16.mxu0 0
    %1010 = vmatpush1.bf16.msra.mxu0 0
    %1011 = vmatprep.subr.bf16.mxu0 0
    %1012 = vmatpush1.bf16.msra.mxu0 0
    %1013 = vmatprep.subr.bf16.mxu0 0
    %1014 = vmatpush1.bf16.msra.mxu0 0
    %1015 = vmatprep.mubr.bf16.mxu0 0
    %1016 = vmatmul.mubr.bf16.gmra.mrb[0].mxu0 %v911
    %v1017 = vpop.f32.mrb[0].mxu0
    %v1018 = vadd.f32 %v933, %v1017
    %v1019 = vpop.f32.mrb[0].mxu0
    %v1020 = vpop.f32.mrb[0].mxu0
    %v1021 = vadd.f32 %v933, %v1020
    %v1022 = vpop.f32.mrb[0].mxu0
    %1023 = vdwg.mxu0
    %vm1024 = vcmp.gt.f32.partialorder %v1018, 0.0
    %vm1025 = vcmp.gt.f32.partialorder %v1021, 0.0
    %v1026 = vmin.f32 %v1018, 0.0
    %v1027 = vmin.f32 %v1021, 0.0
    %v1028 = vmul.f32 %v1026, 1.442695
    %v1029 = vpow.pop %v1028
    %v1030 = vmul.f32 %v1027, 1.442695
    %v1031 = vpow.pop %v1030
    %v1032 = vsub.f32 %v1029, 1.0
    %v1033 = vsub.f32 %v1031, 1.0
    %v1034 = vsel %vm1024, %v1018, %v1032
    %v1035 = vsel %vm1025, %v1021, %v1033
    %v1036 = vpack.c.bf16 %v1035, %v1034
    %v1037 = vld [vmem:[%s9] sm:$0xf]
    %v1038 = vld [vmem:[%s9 + $0x4] sm:$0xf]
    %v1039 = vld [vmem:[%s9 + $0x8] sm:$0xf]
    %v1040 = vld [vmem:[%s9 + $0xc] sm:$0xf]
    %v1041 = vld [vmem:[%s9 + $0x10] sm:$0xf]
    %v1042 = vld [vmem:[%s9 + $0x14] sm:$0xf]
    %v1043 = vld [vmem:[%s9 + $0x18] sm:$0xf]
    %v1044 = vld [vmem:[%s9 + $0x1c] sm:$0xf]
    %v1045 = vld [vmem:[%s9 + $0x20] sm:$0xf]
    %v1046 = vld [vmem:[%s9 + $0x24] sm:$0xf]
    %v1047 = vld [vmem:[%s9 + $0x28] sm:$0xf]
    %v1048 = vld [vmem:[%s9 + $0x2c] sm:$0xf]
    %v1049 = vld [vmem:[%s9 + $0x30] sm:$0xf]
    %v1050 = vld [vmem:[%s9 + $0x34] sm:$0xf]
    %v1051 = vld [vmem:[%s9 + $0x38] sm:$0xf]
    %v1052 = vld [vmem:[%s9 + $0x3c] sm:$0xf]
    %v1053 = vld [vmem:[%s19] sm:$0x1]
    %v1055 = vlaneseq
    %v1056 = vshrl.u32 %v1055, 7
    %v1057 = vsub.s32 0, %v1056
    %v1058 = vrot.slane %v1053, %v1057
    %v1076 = vunpack.c.l.b16 %v1037
    %v1077 = vunpack.c.l.b16 %v1038
    %v1078 = vunpack.c.l.b16 %v1039
    %v1079 = vunpack.c.l.b16 %v1040
    %v1080 = vunpack.c.l.b16 %v1041
    %v1081 = vunpack.c.l.b16 %v1042
    %v1082 = vunpack.c.l.b16 %v1043
    %v1083 = vunpack.c.l.b16 %v1044
    %v1084 = vunpack.c.l.b16 %v1045
    %v1085 = vunpack.c.l.b16 %v1046
    %v1086 = vunpack.c.l.b16 %v1047
    %v1087 = vunpack.c.l.b16 %v1048
    %v1088 = vunpack.c.l.b16 %v1049
    %v1089 = vunpack.c.l.b16 %v1050
    %v1090 = vunpack.c.l.b16 %v1051
    %v1091 = vunpack.c.l.b16 %v1052
    %v1092 = vpack.c.b16 %v1077, %v1076
    %v1093 = vpack.c.b16 %v1079, %v1078
    %v1094 = vpack.c.b16 %v1081, %v1080
    %v1095 = vpack.c.b16 %v1083, %v1082
    %v1096 = vpack.c.b16 %v1085, %v1084
    %v1097 = vpack.c.b16 %v1087, %v1086
    %v1098 = vpack.c.b16 %v1089, %v1088
    %v1099 = vpack.c.b16 %v1091, %v1090
    %1108 = vmatprep.subr.bf16.mxu0 0
    %1109 = vmatpush1.bf16.msra.mxu0 %v1092
    %1110 = vmatprep.subr.bf16.mxu0 0
    %1111 = vmatpush1.bf16.msra.mxu0 %v1093
    %1112 = vmatprep.subr.bf16.mxu0 0
    %1113 = vmatpush1.bf16.msra.mxu0 %v1094
    %1114 = vmatprep.subr.bf16.mxu0 0
    %1115 = vmatpush1.bf16.msra.mxu0 %v1095
    %1116 = vmatprep.subr.bf16.mxu0 0
    %1117 = vmatpush1.bf16.msra.mxu0 %v1096
    %1118 = vmatprep.subr.bf16.mxu0 0
    %1119 = vmatpush1.bf16.msra.mxu0 %v1097
    %1120 = vmatprep.subr.bf16.mxu0 0
    %1121 = vmatpush1.bf16.msra.mxu0 %v1098
    %1122 = vmatprep.subr.bf16.mxu0 0
    %1123 = vmatpush1.bf16.msra.mxu0 %v1099
    %1124 = vmatprep.subr.bf16.mxu0 0
    %1125 = vmatpush1.bf16.msra.mxu0 0
    %1126 = vmatprep.subr.bf16.mxu0 0
    %1127 = vmatpush1.bf16.msra.mxu0 0
    %1128 = vmatprep.subr.bf16.mxu0 0
    %1129 = vmatpush1.bf16.msra.mxu0 0
    %1130 = vmatprep.subr.bf16.mxu0 0
    %1131 = vmatpush1.bf16.msra.mxu0 0
    %1132 = vmatprep.subr.bf16.mxu0 0
    %1133 = vmatpush1.bf16.msra.mxu0 0
    %1134 = vmatprep.subr.bf16.mxu0 0
    %1135 = vmatpush1.bf16.msra.mxu0 0
    %1136 = vmatprep.subr.bf16.mxu0 0
    %1137 = vmatpush1.bf16.msra.mxu0 0
    %1138 = vmatprep.subr.bf16.mxu0 0
    %1139 = vmatpush1.bf16.msra.mxu0 0
    %1140 = vmatprep.mubr.bf16.mxu0 0
    %1141 = vmatmul.mubr.bf16.gmra.mrb[0].mxu0 %v1036
    %v1142 = vpop.f32.mrb[0].mxu0
    %v1143 = vadd.f32 %v1058, %v1142
    %v1144 = vpop.f32.mrb[0].mxu0
    %v1145 = vpop.f32.mrb[0].mxu0
    %v1146 = vadd.f32 %v1058, %v1145
    %v1147 = vpop.f32.mrb[0].mxu0
    %1148 = vdwg.mxu0
    %vm1149 = vcmp.gt.f32.partialorder %v1143, 0.0
    %vm1150 = vcmp.gt.f32.partialorder %v1146, 0.0
    %v1151 = vmin.f32 %v1143, 0.0
    %v1152 = vmin.f32 %v1146, 0.0
    %v1153 = vmul.f32 %v1151, 1.442695
    %v1154 = vpow.pop %v1153
    %v1155 = vmul.f32 %v1152, 1.442695
    %v1156 = vpow.pop %v1155
    %v1157 = vsub.f32 %v1154, 1.0
    %v1158 = vsub.f32 %v1156, 1.0
    %v1159 = vsel %vm1149, %v1143, %v1157
    %v1160 = vsel %vm1150, %v1146, %v1158
    %v1161 = vpack.c.bf16 %v1160, %v1159
    %v1162 = vld [vmem:[%s10] sm:$0xf]
    %v1163 = vld [vmem:[%s10 + $0x4] sm:$0xf]
    %v1164 = vld [vmem:[%s10 + $0x8] sm:$0xf]
    %v1165 = vld [vmem:[%s10 + $0xc] sm:$0xf]
    %v1166 = vld [vmem:[%s10 + $0x10] sm:$0xf]
    %v1167 = vld [vmem:[%s10 + $0x14] sm:$0xf]
    %v1168 = vld [vmem:[%s10 + $0x18] sm:$0xf]
    %v1169 = vld [vmem:[%s10 + $0x1c] sm:$0xf]
    %v1170 = vld [vmem:[%s10 + $0x20] sm:$0xf]
    %v1171 = vld [vmem:[%s10 + $0x24] sm:$0xf]
    %v1172 = vld [vmem:[%s10 + $0x28] sm:$0xf]
    %v1173 = vld [vmem:[%s10 + $0x2c] sm:$0xf]
    %v1174 = vld [vmem:[%s10 + $0x30] sm:$0xf]
    %v1175 = vld [vmem:[%s10 + $0x34] sm:$0xf]
    %v1176 = vld [vmem:[%s10 + $0x38] sm:$0xf]
    %v1177 = vld [vmem:[%s10 + $0x3c] sm:$0xf]
    %v1178 = vld [vmem:[%s20] sm:$0x1]
    %v1180 = vlaneseq
    %v1181 = vshrl.u32 %v1180, 7
    %v1182 = vsub.s32 0, %v1181
    %v1183 = vrot.slane %v1178, %v1182
    %v1201 = vunpack.c.l.b16 %v1162
    %v1202 = vunpack.c.l.b16 %v1163
    %v1203 = vunpack.c.l.b16 %v1164
    %v1204 = vunpack.c.l.b16 %v1165
    %v1205 = vunpack.c.l.b16 %v1166
    %v1206 = vunpack.c.l.b16 %v1167
    %v1207 = vunpack.c.l.b16 %v1168
    %v1208 = vunpack.c.l.b16 %v1169
    %v1209 = vunpack.c.l.b16 %v1170
    %v1210 = vunpack.c.l.b16 %v1171
    %v1211 = vunpack.c.l.b16 %v1172
    %v1212 = vunpack.c.l.b16 %v1173
    %v1213 = vunpack.c.l.b16 %v1174
    %v1214 = vunpack.c.l.b16 %v1175
    %v1215 = vunpack.c.l.b16 %v1176
    %v1216 = vunpack.c.l.b16 %v1177
    %v1217 = vpack.c.b16 %v1202, %v1201
    %v1218 = vpack.c.b16 %v1204, %v1203
    %v1219 = vpack.c.b16 %v1206, %v1205
    %v1220 = vpack.c.b16 %v1208, %v1207
    %v1221 = vpack.c.b16 %v1210, %v1209
    %v1222 = vpack.c.b16 %v1212, %v1211
    %v1223 = vpack.c.b16 %v1214, %v1213
    %v1224 = vpack.c.b16 %v1216, %v1215
    %1233 = vmatprep.subr.bf16.mxu0 0
    %1234 = vmatpush1.bf16.msra.mxu0 %v1217
    %1235 = vmatprep.subr.bf16.mxu0 0
    %1236 = vmatpush1.bf16.msra.mxu0 %v1218
    %1237 = vmatprep.subr.bf16.mxu0 0
    %1238 = vmatpush1.bf16.msra.mxu0 %v1219
    %1239 = vmatprep.subr.bf16.mxu0 0
    %1240 = vmatpush1.bf16.msra.mxu0 %v1220
    %1241 = vmatprep.subr.bf16.mxu0 0
    %1242 = vmatpush1.bf16.msra.mxu0 %v1221
    %1243 = vmatprep.subr.bf16.mxu0 0
    %1244 = vmatpush1.bf16.msra.mxu0 %v1222
    %1245 = vmatprep.subr.bf16.mxu0 0
    %1246 = vmatpush1.bf16.msra.mxu0 %v1223
    %1247 = vmatprep.subr.bf16.mxu0 0
    %1248 = vmatpush1.bf16.msra.mxu0 %v1224
    %1249 = vmatprep.subr.bf16.mxu0 0
    %1250 = vmatpush1.bf16.msra.mxu0 0
    %1251 = vmatprep.subr.bf16.mxu0 0
    %1252 = vmatpush1.bf16.msra.mxu0 0
    %1253 = vmatprep.subr.bf16.mxu0 0
    %1254 = vmatpush1.bf16.msra.mxu0 0
    %1255 = vmatprep.subr.bf16.mxu0 0
    %1256 = vmatpush1.bf16.msra.mxu0 0
    %1257 = vmatprep.subr.bf16.mxu0 0
    %1258 = vmatpush1.bf16.msra.mxu0 0
    %1259 = vmatprep.subr.bf16.mxu0 0
    %1260 = vmatpush1.bf16.msra.mxu0 0
    %1261 = vmatprep.subr.bf16.mxu0 0
    %1262 = vmatpush1.bf16.msra.mxu0 0
    %1263 = vmatprep.subr.bf16.mxu0 0
    %1264 = vmatpush1.bf16.msra.mxu0 0
    %1265 = vmatprep.mubr.bf16.mxu0 0
    %1266 = vmatmul.mubr.bf16.gmra.mrb[0].mxu0 %v1161
    %v1267 = vpop.f32.mrb[0].mxu0
    %v1268 = vadd.f32 %v1183, %v1267
    %v1269 = vpop.f32.mrb[0].mxu0
    %v1270 = vpop.f32.mrb[0].mxu0
    %v1271 = vadd.f32 %v1183, %v1270
    %v1272 = vpop.f32.mrb[0].mxu0
    %1273 = vdwg.mxu0
    %vm1274 = vcmask 261120
    %1275 = vst.msk [vmem:[#allocation2] sm:$0xff] %vm1274, %v1268
    %1276 = vst.msk [vmem:[#allocation2 + $0x8] sm:$0xff] %vm1274, %v1271
    %v1277 = vpack.c.bf16 %v1271, %v1268
    %v1278 = vld [vmem:[%s21] sm:$0xf]
    %v1279 = vld [vmem:[%s21 + $0x4] sm:$0xf]
    %v1280 = vld [vmem:[%s21 + $0x8] sm:$0xf]
    %v1281 = vld [vmem:[%s21 + $0xc] sm:$0xf]
    %v1282 = vld [vmem:[%s22] sm:$0x1]
    %v1284 = vlaneseq
    %v1285 = vshrl.u32 %v1284, 7
    %v1286 = vsub.s32 0, %v1285
    %v1287 = vrot.slane %v1282, %v1286
    %v1293 = vunpack.c.l.b16 %v1278
    %v1294 = vunpack.c.l.b16 %v1279
    %v1295 = vunpack.c.l.b16 %v1280
    %v1296 = vunpack.c.l.b16 %v1281
    %v1297 = vpack.c.b16 %v1294, %v1293
    %v1298 = vpack.c.b16 %v1296, %v1295
    %v1302 = vsel %vm1274, %v1277, 0
    %1304 = vmatprep.subr.bf16.mxu0 0
    %1305 = vmatpush1.bf16.msra.mxu0 %v1297
    %1306 = vmatprep.subr.bf16.mxu0 0
    %1307 = vmatpush1.bf16.msra.mxu0 %v1298
    %1308 = vmatprep.subr.bf16.mxu0 0
    %1309 = vmatpush1.bf16.msra.mxu0 0
    %1310 = vmatprep.subr.bf16.mxu0 0
    %1311 = vmatpush1.bf16.msra.mxu0 0
    %1312 = vmatprep.subr.bf16.mxu0 0
    %1313 = vmatpush1.bf16.msra.mxu0 0
    %1314 = vmatprep.subr.bf16.mxu0 0
    %1315 = vmatpush1.bf16.msra.mxu0 0
    %1316 = vmatprep.subr.bf16.mxu0 0
    %1317 = vmatpush1.bf16.msra.mxu0 0
    %1318 = vmatprep.subr.bf16.mxu0 0
    %1319 = vmatpush1.bf16.msra.mxu0 0
    %1320 = vmatprep.subr.bf16.mxu0 0
    %1321 = vmatpush1.bf16.msra.mxu0 0
    %1322 = vmatprep.subr.bf16.mxu0 0
    %1323 = vmatpush1.bf16.msra.mxu0 0
    %1324 = vmatprep.subr.bf16.mxu0 0
    %1325 = vmatpush1.bf16.msra.mxu0 0
    %1326 = vmatprep.subr.bf16.mxu0 0
    %1327 = vmatpush1.bf16.msra.mxu0 0
    %1328 = vmatprep.subr.bf16.mxu0 0
    %1329 = vmatpush1.bf16.msra.mxu0 0
    %1330 = vmatprep.subr.bf16.mxu0 0
    %1331 = vmatpush1.bf16.msra.mxu0 0
    %1332 = vmatprep.subr.bf16.mxu0 0
    %1333 = vmatpush1.bf16.msra.mxu0 0
    %1334 = vmatprep.subr.bf16.mxu0 0
    %1335 = vmatpush1.bf16.msra.mxu0 0
    %1336 = vmatprep.mubr.bf16.mxu0 0
    %1337 = vmatmul.mubr.bf16.gmra.mrb[0].mxu0 %v1302
    %v1338 = vpop.f32.mrb[0].mxu0
    %v1339 = vadd.f32 %v1287, %v1338
    %v1340 = vpop.f32.mrb[0].mxu0
    %v1341 = vpop.f32.mrb[0].mxu0
    %v1342 = vadd.f32 %v1287, %v1341
    %v1343 = vpop.f32.mrb[0].mxu0
    %1344 = vdwg.mxu0
    %v1345 = vsub.f32 0.0, %v1339
    %v1346 = vsub.f32 0.0, %v1342
    %v1347 = vmul.f32 %v1345, 1.442695
    %v1348 = vpow.pop %v1347
    %v1349 = vmul.f32 %v1346, 1.442695
    %v1350 = vpow.pop %v1349
    %v1351 = vadd.f32 %v1348, 1.0
    %v1352 = vadd.f32 %v1350, 1.0
    %v1353 = vrcp.pop %v1351
    %v1354 = vmul.f32 1.0, %v1353
    %v1355 = vrcp.pop %v1352
    %v1356 = vmul.f32 1.0, %v1355
    %1357 = vst.msk [vmem:[%s24] sm:$0xff] %vm1274, %v1354
    %1358 = vst.msk [vmem:[%s24 + $0x8] sm:$0xff] %vm1274, %v1356
    // Predicated region
    $region94: #{simulation_net_forward.1} parent=1 // pred_check
      _
    $region95: #{simulation_net_forward.1} parent=1 // pred_check_branch
      %1360 = sbr.rel (0) target = $region97
    $region96: #{simulation_net_forward.1} parent=1 // pred_region
      %s1362 = ssub.s32 256, 256
      %1363 = vsyncadd [#allocation3], %s1362
      %s1364 = sshll.u32 [#allocation2], 4
      %s1365 = int_to_ptr.vmem [resolvable:$true] %s1364
      %1370 = dma.vmem_to_hbm [thread:$0]  %s1365, 256, %s23, [#allocation3], 128, 128, 8
    $region97: #{simulation_net_forward.1} parent=1 // pred_fallthru
      _
    // Predicated region
    $region98: #{simulation_net_forward.1} parent=1 // pred_check
      _
    $region99: #{simulation_net_forward.1} parent=1 // pred_check_branch
      %1372 = sbr.rel (0) target = $region101
    $region100: #{simulation_net_forward.1} parent=1 // pred_region
      _
    $region101: #{simulation_net_forward.1} parent=1 // pred_fallthru
      _
    // Predicated region
    $region102: #{simulation_net_forward.1} parent=1 // pred_check
      _
    $region103: #{simulation_net_forward.1} parent=1 // pred_check_branch
      %1374 = sbr.rel (0) target = $region105
    $region104: #{simulation_net_forward.1} parent=1 // pred_region
      %1375 = dma.done [#allocation3], 256
    $region105: #{simulation_net_forward.1} parent=1 // pred_fallthru
      _
    // Predicated region
    $region106: #{simulation_net_forward.1} parent=1 // pred_check
      _
    $region107: #{simulation_net_forward.1} parent=1 // pred_check_branch
      %1377 = sbr.rel (0) target = $region109
    $region108: #{simulation_net_forward.1} parent=1 // pred_region
      _
    $region109: #{simulation_net_forward.1} parent=1 // pred_fallthru
      _
    %1378 = vsyncpa [#allocation3], 1

</llo_original>
